<compile_context>
chip_gen: v5e
topology: v5e:2x2
jax: 0.10.0
libtpu: 0.0.40
codegen_flags: <defaults>
</compile_context>

<pallas_src>
import functools
import math

import jax
import jax.numpy as jnp
from jax.experimental import pallas as pl
from jax.experimental.pallas import tpu as pltpu

EPS = 1e-5  # nn.BatchNorm2d default eps


def _round_up(x, m):
    return (x + m - 1) // m * m


def _cdiv(a, b):
    return -(-a // b)


# ----------------------------------------------------------------------------
# shared in-kernel conv: k*k shifted MXU matmuls over one row band
# ----------------------------------------------------------------------------
def _conv_band(x_ref, w_ref, *, k, th, w_out):
    """x_ref: (1, th+k-1, w_out+k-1, Cin_p) VMEM ref; w_ref: (k*k, Cin_p, Cp).
    Returns the band's conv outputs as (th*w_out, Cp) float32."""
    cin = x_ref.shape[-1]
    acc = None
    for kh in range(k):
        for kw in range(k):
            lhs = x_ref[0, kh:kh + th, kw:kw + w_out, :].reshape(th * w_out, cin)
            rhs = w_ref[kh * k + kw]                       # (Cin_p, Cp)
            part = jnp.dot(lhs, rhs, preferred_element_type=jnp.float32)
            acc = part if acc is None else acc + part
    return acc


# ----------------------------------------------------------------------------
# pass 1: per-channel sum / sum-of-squares of the conv output (no y writeback)
# ----------------------------------------------------------------------------
def _make_stats_kernel(*, k, th, w_out, h_out, nb_h, nbc):
    def kernel(x_ref, w_ref, stats_ref):
        i = pl.program_id(1)

        @pl.when(i == 0)
        def _():
            stats_ref[...] = jnp.zeros_like(stats_ref)

        y = _conv_band(x_ref, w_ref, k=k, th=th, w_out=w_out)

        # Mask conv rows past the true output height (partial last band).  The
        # all-zero bands used to even out the megacore split already contribute
        # nothing (zero input -> zero conv output).
        g = pl.program_id(0) * nbc + i
        row_start = jax.lax.rem(g, jnp.int32(nb_h)) * th
        limit = (h_out - row_start) * w_out
        flat = jax.lax.broadcasted_iota(jnp.int32, (th * w_out, 1), 0)
        y = jnp.where(flat < limit, y, 0.0)

        stats_ref[0, 0:1, :] += jnp.sum(y, axis=0, keepdims=True)
        stats_ref[0, 1:2, :] += jnp.sum(y * y, axis=0, keepdims=True)

    return kernel


# ----------------------------------------------------------------------------
# pass 2: recompute the conv GEMM, apply folded BN (y*a + b) + ReLU
# ----------------------------------------------------------------------------
def _make_apply_kernel(*, k, th, w_out):
    def kernel(x_ref, w_ref, ab_ref, o_ref):
        y = _conv_band(x_ref, w_ref, k=k, th=th, w_out=w_out)
        yn = y * ab_ref[0:1, :] + ab_ref[1:2, :]
        o_ref[...] = jnp.maximum(yn, 0.0).astype(o_ref.dtype)

    return kernel


def conv_module_ex(x_nchw, w_oihw, gamma, beta, *, kernel_size=3, padding=1,
                   rows_per_band=None, use_bf16_matmul=True,
                   return_nhwc=False):
    """Conv2d(bias=False, stride=1, dilation=1, groups=1) -> BatchNorm2d
    (training-mode batch statistics) -> ReLU, as two fused Pallas passes."""
    N, Cin, H, W = x_nchw.shape
    Cout = w_oihw.shape[0]
    k = kernel_size
    p = padding
    h_out = H + 2 * p - k + 1
    w_out = W + 2 * p - k + 1
    assert h_out > 0 and w_out > 0
    m_true = N * h_out * w_out                     # pixels entering BN stats

    mm_dtype = jnp.bfloat16 if use_bf16_matmul else jnp.float32
    itemsize = jnp.dtype(mm_dtype).itemsize
    sub = 16 if mm_dtype == jnp.bfloat16 else 8    # sublane pack

    cp = _round_up(Cout, 128)                      # lane-dense output channels
    cin_p = _round_up(Cin, 128) if Cin < 128 else _round_up(Cin, 8)

    # band height: th conv-output rows per grid step; keep th*w_out a multiple
    # of the sublane pack so GEMM / store tiles are unmasked.
    unit = sub // math.gcd(w_out, sub)
    if rows_per_band is None:
        rows_per_band = max(1, 2048 // w_out)      # ~2k GEMM rows per step
    th = min(_round_up(rows_per_band, unit), _round_up(h_out, unit))
    nb_h = _cdiv(h_out, th)                        # bands per image
    nb = N * nb_h                                  # real bands
    nc = 2 if nb >= 2 else 1                       # megacore chunks (v7x)
    nbc = _cdiv(nb, nc)
    nbp = nc * nbc                                 # bands incl. zero padding
    band_rows = th + k - 1
    wp2 = w_out + k - 1

    # ---- XLA glue: NCHW->NHWC, zero pad, overlapping row bands --------------
    x_nhwc = jnp.transpose(x_nchw, (0, 2, 3, 1)).astype(mm_dtype)
    row_pad_hi = nb_h * th + (k - 1) - p - H
    xp = jnp.pad(x_nhwc, ((0, 0), (p, row_pad_hi), (p, p), (0, cin_p - Cin)))
    bands = jnp.stack([xp[:, i * th:i * th + band_rows] for i in range(nb_h)],
                      axis=1).reshape(nb, band_rows, wp2, cin_p)
    if nbp > nb:
        bands = jnp.pad(bands, ((0, nbp - nb), (0, 0), (0, 0), (0, 0)))

    # weights: (Cout, Cin, k, k) -> (k*k, Cin_p, Cp), taps ordered (kh, kw)
    w_t = jnp.transpose(w_oihw, (2, 3, 1, 0)).reshape(k * k, Cin, Cout)
    w_t = jnp.pad(w_t, ((0, 0), (0, cin_p - Cin), (0, cp - Cout))).astype(mm_dtype)

    # VMEM budget derived from actual tile footprint (v7x 64 MiB-safe fallback).
    def _vmem_limit(extra):
        band_b = band_rows * _round_up(wp2, sub) * _round_up(cin_p, 128) * itemsize
        w_b = k * k * _round_up(cin_p, sub) * cp * itemsize
        y_b = th * w_out * cp * 4
        lhs_b = th * w_out * _round_up(cin_p, 128) * itemsize
        need = 2 * band_b + 2 * w_b + 2 * y_b + lhs_b + extra
        try:
            cap = int(pltpu.get_tpu_info().vmem_capacity_bytes * 0.85)
        except Exception:
            cap = int(64 * 1024 * 1024 * 0.85)
        return int(min(max(int(need * 1.3), 24 * 1024 * 1024), cap))

    flops_band = 2 * th * w_out * cin_p * cp * k * k
    band_bytes = band_rows * wp2 * cin_p * itemsize
    w_bytes = k * k * cin_p * cp * itemsize

    # ---- pass 1: streamed conv GEMM -> per-channel (sum, sumsq) partials ----
    # TODO(synk): single-buffer the weight operand (pipeline_mode=pl.Buffered(1))
    # once validated on the target jax version; its index_map is constant so it
    # is DMA'd only once but still reserves two pipeline buffers.
    stats_part = pl.pallas_call(
        _make_stats_kernel(k=k, th=th, w_out=w_out, h_out=h_out,
                           nb_h=nb_h, nbc=nbc),
        out_shape=jax.ShapeDtypeStruct((nc, 2, cp), jnp.float32),
        grid=(nc, nbc),
        in_specs=[
            pl.BlockSpec((1, band_rows, wp2, cin_p),
                         lambda c, i: (c * nbc + i, 0, 0, 0)),
            pl.BlockSpec((k * k, cin_p, cp), lambda c, i: (0, 0, 0)),
        ],
        out_specs=pl.BlockSpec((1, 2, cp), lambda c, i: (c, 0, 0)),
        compiler_params=pltpu.CompilerParams(
            dimension_semantics=("parallel", "arbitrary"),
            vmem_limit_bytes=_vmem_limit(4 * 2 * cp * 4)),
        cost_estimate=pl.CostEstimate(
            flops=int(flops_band * nbp), transcendentals=0,
            bytes_accessed=int(nbp * band_bytes + w_bytes + nc * 2 * cp * 4)),
    )(bands, w_t)

    # ---- tiny glue: reduce partials, fold BN into a single FMA (a, b) -------
    stats = jnp.sum(stats_part, axis=0)            # (2, Cp)
    mean = stats[0] / m_true
    # TODO(synk): E[y^2]-E[y]^2 in f32 can lose precision at very large N*H*W
    # when |mean|^2 >> var; switch to a centered second stats pass if needed.
    var = jnp.maximum(stats[1] / m_true - mean * mean, 0.0)   # biased (train)
    inv = jax.lax.rsqrt(var + EPS)
    gamma_p = jnp.pad(gamma.astype(jnp.float32), (0, cp - Cout))
    beta_p = jnp.pad(beta.astype(jnp.float32), (0, cp - Cout))
    a = inv * gamma_p
    b = beta_p - mean * a
    ab = jnp.stack([a, b], axis=0)                 # (2, Cp)

    # ---- pass 2: recompute conv, apply y*a+b and ReLU, write output ---------
    out_dtype = x_nchw.dtype
    out_flat = pl.pallas_call(
        _make_apply_kernel(k=k, th=th, w_out=w_out),
        out_shape=jax.ShapeDtypeStruct((nb * th * w_out, cp), out_dtype),
        grid=(nb,),
        in_specs=[
            pl.BlockSpec((1, band_rows, wp2, cin_p), lambda g: (g, 0, 0, 0)),
            pl.BlockSpec((k * k, cin_p, cp), lambda g: (0, 0, 0)),
            pl.BlockSpec((2, cp), lambda g: (0, 0)),
        ],
        out_specs=pl.BlockSpec((th * w_out, cp), lambda g: (g, 0)),
        compiler_params=pltpu.CompilerParams(
            dimension_semantics=("parallel",),
            vmem_limit_bytes=_vmem_limit(
                2 * th * w_out * cp * jnp.dtype(out_dtype).itemsize)),
        cost_estimate=pl.CostEstimate(
            flops=int(flops_band * nb), transcendentals=0,
            bytes_accessed=int(nb * band_bytes + w_bytes
                               + nb * th * w_out * cp
                               * jnp.dtype(out_dtype).itemsize)),
    )(bands, w_t, ab)

    # ---- epilogue: un-band, drop padding, NCHW ------------------------------
    out = out_flat.reshape(N, nb_h, th, w_out, cp)[..., :Cout]
    out = out.reshape(N, nb_h * th, w_out, Cout)[:, :h_out]
    if return_nhwc:
        return out
    # TODO(synk): the NCHW transpose is an extra full HBM round trip; pass
    # return_nhwc=True if the consumer accepts channels-last.
    return jnp.transpose(out, (0, 3, 1, 2))


def reference(x_nchw, w_oihw, gamma, beta, padding=1):
    # pure-JAX reference for correctness check
    y = jax.lax.conv_general_dilated(
        x_nchw, w_oihw, window_strides=(1, 1),
        padding=[(padding, padding), (padding, padding)],
        dimension_numbers=("NCHW", "OIHW", "NCHW"))
    mean = jnp.mean(y, axis=(0, 2, 3), keepdims=True)
    var = jnp.mean((y - mean) ** 2, axis=(0, 2, 3), keepdims=True)
    yn = (y - mean) * jax.lax.rsqrt(var + EPS)
    yn = yn * gamma.reshape(1, -1, 1, 1) + beta.reshape(1, -1, 1, 1)
    return jnp.maximum(yn, 0.0)


if __name__ == "__main__":
    # shapes consistent with ConvModule_ex(in=4, out=8, kernel_size=3, padding=1)
    N, Cin, Cout, H, W, K = 2, 4, 8, 16, 16, 3

    key = jax.random.PRNGKey(0)
    kx, kw, kg, kb = jax.random.split(key, 4)

    x = jax.random.normal(kx, (N, Cin, H, W), dtype=jnp.float32)
    fan_in = Cin * K * K
    bound = 1.0 / (fan_in ** 0.5)
    w = jax.random.uniform(kw, (Cout, Cin, K, K), dtype=jnp.float32,
                           minval=-bound, maxval=bound)
    gamma = 1.0 + 0.1 * jax.random.normal(kg, (Cout,), dtype=jnp.float32)
    beta = 0.1 * jax.random.normal(kb, (Cout,), dtype=jnp.float32)

    ref = reference(x, w, gamma, beta, padding=1)

    # Exact-numerics path (f32 MXU operands); rows_per_band=6 exercises the
    # multi-band accumulation + partial-band masking + megacore-split paths.
    f32_fn = jax.jit(functools.partial(conv_module_ex, kernel_size=K, padding=1,
                                       use_bf16_matmul=False, rows_per_band=6))
    out_f32 = jax.block_until_ready(f32_fn(x, w, gamma, beta))
    assert out_f32.shape == (N, Cout, H, W), out_f32.shape
    assert jnp.allclose(out_f32, ref, atol=1e-4, rtol=1e-4), \
        float(jnp.max(jnp.abs(out_f32 - ref)))

    # Default fast path: bf16 MXU operands (f32 accumulation) on all chips.
    fast_fn = jax.jit(functools.partial(conv_module_ex, kernel_size=K, padding=1))
    out_fast = jax.block_until_ready(fast_fn(x, w, gamma, beta))
    assert out_fast.shape == (N, Cout, H, W), out_fast.shape
    assert jnp.allclose(out_fast, ref, atol=1e-1, rtol=1e-1), \
        float(jnp.max(jnp.abs(out_fast - ref)))

    print("KERNEL_OK")
</pallas_src>

<mosaic_0001>
module attributes {stable_mosaic.version = 11 : i64} {
  func.func @kernel(%arg0: i32, %arg1: i32, %arg2: memref<1x8x18x128xf32, #tpu.memory_space<vmem>>, %arg3: memref<9x128x128xf32, #tpu.memory_space<vmem>>, %arg4: memref<1x2x128xf32, #tpu.memory_space<vmem>>) attributes {dimension_semantics = [#tpu.dimension_semantics<parallel>, #tpu.dimension_semantics<arbitrary>], iteration_bounds = array<i64: 2, 3>, scalar_prefetch = 0 : i64, scratch_operands = 0 : i64, tpu.core_type = #tpu.core_type<tc>, window_params = [{transform_indices = @transform_0, window_bounds = array<i64: 1, 8, 18, 128>}, {pipeline_mode = #tpu.pipeline_mode<synchronous>, transform_indices = @transform_1, window_bounds = array<i64: 9, 128, 128>}, {transform_indices = @transform_2, window_bounds = array<i64: 1, 2, 128>}]} {
    %c0_i32 = arith.constant 0 : i32
    %0 = arith.cmpi eq, %arg1, %c0_i32 : i32
    %1 = arith.extui %0 : i1 to i32
    %c0_i32_0 = arith.constant 0 : i32
    %2 = arith.cmpi ne, %1, %c0_i32_0 : i32
    scf.if %2 {
      %cst_80 = arith.constant 0.000000e+00 : f32
      %95 = vector.broadcast %cst_80 : f32 to vector<1x2x128xf32>
      %c0_81 = arith.constant 0 : index
      %c0_82 = arith.constant 0 : index
      %c0_83 = arith.constant 0 : index
      %96 = vector.load %arg4[%c0_81, %c0_82, %c0_83] : memref<1x2x128xf32, #tpu.memory_space<vmem>>, vector<1x2x128xf32>
      tpu.vector_store %arg4[%c0_81, %c0_82, %c0_83], %95 {strides = array<i32>} : memref<1x2x128xf32, #tpu.memory_space<vmem>>, vector<1x2x128xf32>,
    } else {
    }
    %c0 = arith.constant 0 : index
    %c0_1 = arith.constant 0 : index
    %c0_2 = arith.constant 0 : index
    %c0_3 = arith.constant 0 : index
    %3 = vector.load %arg2[%c0, %c0_1, %c0_2, %c0_3] : memref<1x8x18x128xf32, #tpu.memory_space<vmem>>, vector<1x6x16x128xf32>
    %4 = vector.shape_cast %3 : vector<1x6x16x128xf32> to vector<6x16x128xf32>
    %5 = vector.shape_cast %4 : vector<6x16x128xf32> to vector<96x128xf32>
    %c0_4 = arith.constant 0 : index
    %c0_5 = arith.constant 0 : index
    %c0_6 = arith.constant 0 : index
    %6 = vector.load %arg3[%c0_4, %c0_5, %c0_6] : memref<9x128x128xf32, #tpu.memory_space<vmem>>, vector<1x128x128xf32>
    %7 = vector.shape_cast %6 : vector<1x128x128xf32> to vector<128x128xf32>
    %cst = arith.constant dense<0.000000e+00> : vector<96x128xf32>
    %8 = tpu.matmul %5, %7, %cst {dimension_numbers = #tpu.dot_dimension_numbers<[1], [0], [0], [1], [0, 0, 1, 1], [], []>} : vector<96x128xf32>, vector<128x128xf32>, vector<96x128xf32> -> vector<96x128xf32>
    %c0_7 = arith.constant 0 : index
    %c0_8 = arith.constant 0 : index
    %c1 = arith.constant 1 : index
    %c0_9 = arith.constant 0 : index
    %9 = vector.load %arg2[%c0_7, %c0_8, %c1, %c0_9] : memref<1x8x18x128xf32, #tpu.memory_space<vmem>>, vector<1x6x16x128xf32>
    %10 = vector.shape_cast %9 : vector<1x6x16x128xf32> to vector<6x16x128xf32>
    %11 = vector.shape_cast %10 : vector<6x16x128xf32> to vector<96x128xf32>
    %c1_10 = arith.constant 1 : index
    %c0_11 = arith.constant 0 : index
    %c0_12 = arith.constant 0 : index
    %12 = vector.load %arg3[%c1_10, %c0_11, %c0_12] : memref<9x128x128xf32, #tpu.memory_space<vmem>>, vector<1x128x128xf32>
    %13 = vector.shape_cast %12 : vector<1x128x128xf32> to vector<128x128xf32>
    %cst_13 = arith.constant dense<0.000000e+00> : vector<96x128xf32>
    %14 = tpu.matmul %11, %13, %cst_13 {dimension_numbers = #tpu.dot_dimension_numbers<[1], [0], [0], [1], [0, 0, 1, 1], [], []>} : vector<96x128xf32>, vector<128x128xf32>, vector<96x128xf32> -> vector<96x128xf32>
    %15 = arith.addf %8, %14 : vector<96x128xf32>
    %c0_14 = arith.constant 0 : index
    %c0_15 = arith.constant 0 : index
    %c2 = arith.constant 2 : index
    %c0_16 = arith.constant 0 : index
    %16 = vector.load %arg2[%c0_14, %c0_15, %c2, %c0_16] : memref<1x8x18x128xf32, #tpu.memory_space<vmem>>, vector<1x6x16x128xf32>
    %17 = vector.shape_cast %16 : vector<1x6x16x128xf32> to vector<6x16x128xf32>
    %18 = vector.shape_cast %17 : vector<6x16x128xf32> to vector<96x128xf32>
    %c2_17 = arith.constant 2 : index
    %c0_18 = arith.constant 0 : index
    %c0_19 = arith.constant 0 : index
    %19 = vector.load %arg3[%c2_17, %c0_18, %c0_19] : memref<9x128x128xf32, #tpu.memory_space<vmem>>, vector<1x128x128xf32>
    %20 = vector.shape_cast %19 : vector<1x128x128xf32> to vector<128x128xf32>
    %cst_20 = arith.constant dense<0.000000e+00> : vector<96x128xf32>
    %21 = tpu.matmul %18, %20, %cst_20 {dimension_numbers = #tpu.dot_dimension_numbers<[1], [0], [0], [1], [0, 0, 1, 1], [], []>} : vector<96x128xf32>, vector<128x128xf32>, vector<96x128xf32> -> vector<96x128xf32>
    %22 = arith.addf %15, %21 : vector<96x128xf32>
    %c0_21 = arith.constant 0 : index
    %c1_22 = arith.constant 1 : index
    %c0_23 = arith.constant 0 : index
    %c0_24 = arith.constant 0 : index
    %23 = vector.load %arg2[%c0_21, %c1_22, %c0_23, %c0_24] : memref<1x8x18x128xf32, #tpu.memory_space<vmem>>, vector<1x6x16x128xf32>
    %24 = vector.shape_cast %23 : vector<1x6x16x128xf32> to vector<6x16x128xf32>
    %25 = vector.shape_cast %24 : vector<6x16x128xf32> to vector<96x128xf32>
    %c3 = arith.constant 3 : index
    %c0_25 = arith.constant 0 : index
    %c0_26 = arith.constant 0 : index
    %26 = vector.load %arg3[%c3, %c0_25, %c0_26] : memref<9x128x128xf32, #tpu.memory_space<vmem>>, vector<1x128x128xf32>
    %27 = vector.shape_cast %26 : vector<1x128x128xf32> to vector<128x128xf32>
    %cst_27 = arith.constant dense<0.000000e+00> : vector<96x128xf32>
    %28 = tpu.matmul %25, %27, %cst_27 {dimension_numbers = #tpu.dot_dimension_numbers<[1], [0], [0], [1], [0, 0, 1, 1], [], []>} : vector<96x128xf32>, vector<128x128xf32>, vector<96x128xf32> -> vector<96x128xf32>
    %29 = arith.addf %22, %28 : vector<96x128xf32>
    %c0_28 = arith.constant 0 : index
    %c1_29 = arith.constant 1 : index
    %c1_30 = arith.constant 1 : index
    %c0_31 = arith.constant 0 : index
    %30 = vector.load %arg2[%c0_28, %c1_29, %c1_30, %c0_31] : memref<1x8x18x128xf32, #tpu.memory_space<vmem>>, vector<1x6x16x128xf32>
    %31 = vector.shape_cast %30 : vector<1x6x16x128xf32> to vector<6x16x128xf32>
    %32 = vector.shape_cast %31 : vector<6x16x128xf32> to vector<96x128xf32>
    %c4 = arith.constant 4 : index
    %c0_32 = arith.constant 0 : index
    %c0_33 = arith.constant 0 : index
    %33 = vector.load %arg3[%c4, %c0_32, %c0_33] : memref<9x128x128xf32, #tpu.memory_space<vmem>>, vector<1x128x128xf32>
    %34 = vector.shape_cast %33 : vector<1x128x128xf32> to vector<128x128xf32>
    %cst_34 = arith.constant dense<0.000000e+00> : vector<96x128xf32>
    %35 = tpu.matmul %32, %34, %cst_34 {dimension_numbers = #tpu.dot_dimension_numbers<[1], [0], [0], [1], [0, 0, 1, 1], [], []>} : vector<96x128xf32>, vector<128x128xf32>, vector<96x128xf32> -> vector<96x128xf32>
    %36 = arith.addf %29, %35 : vector<96x128xf32>
    %c0_35 = arith.constant 0 : index
    %c1_36 = arith.constant 1 : index
    %c2_37 = arith.constant 2 : index
    %c0_38 = arith.constant 0 : index
    %37 = vector.load %arg2[%c0_35, %c1_36, %c2_37, %c0_38] : memref<1x8x18x128xf32, #tpu.memory_space<vmem>>, vector<1x6x16x128xf32>
    %38 = vector.shape_cast %37 : vector<1x6x16x128xf32> to vector<6x16x128xf32>
    %39 = vector.shape_cast %38 : vector<6x16x128xf32> to vector<96x128xf32>
    %c5 = arith.constant 5 : index
    %c0_39 = arith.constant 0 : index
    %c0_40 = arith.constant 0 : index
    %40 = vector.load %arg3[%c5, %c0_39, %c0_40] : memref<9x128x128xf32, #tpu.memory_space<vmem>>, vector<1x128x128xf32>
    %41 = vector.shape_cast %40 : vector<1x128x128xf32> to vector<128x128xf32>
    %cst_41 = arith.constant dense<0.000000e+00> : vector<96x128xf32>
    %42 = tpu.matmul %39, %41, %cst_41 {dimension_numbers = #tpu.dot_dimension_numbers<[1], [0], [0], [1], [0, 0, 1, 1], [], []>} : vector<96x128xf32>, vector<128x128xf32>, vector<96x128xf32> -> vector<96x128xf32>
    %43 = arith.addf %36, %42 : vector<96x128xf32>
    %c0_42 = arith.constant 0 : index
    %c2_43 = arith.constant 2 : index
    %c0_44 = arith.constant 0 : index
    %c0_45 = arith.constant 0 : index
    %44 = vector.load %arg2[%c0_42, %c2_43, %c0_44, %c0_45] : memref<1x8x18x128xf32, #tpu.memory_space<vmem>>, vector<1x6x16x128xf32>
    %45 = vector.shape_cast %44 : vector<1x6x16x128xf32> to vector<6x16x128xf32>
    %46 = vector.shape_cast %45 : vector<6x16x128xf32> to vector<96x128xf32>
    %c6 = arith.constant 6 : index
    %c0_46 = arith.constant 0 : index
    %c0_47 = arith.constant 0 : index
    %47 = vector.load %arg3[%c6, %c0_46, %c0_47] : memref<9x128x128xf32, #tpu.memory_space<vmem>>, vector<1x128x128xf32>
    %48 = vector.shape_cast %47 : vector<1x128x128xf32> to vector<128x128xf32>
    %cst_48 = arith.constant dense<0.000000e+00> : vector<96x128xf32>
    %49 = tpu.matmul %46, %48, %cst_48 {dimension_numbers = #tpu.dot_dimension_numbers<[1], [0], [0], [1], [0, 0, 1, 1], [], []>} : vector<96x128xf32>, vector<128x128xf32>, vector<96x128xf32> -> vector<96x128xf32>
    %50 = arith.addf %43, %49 : vector<96x128xf32>
    %c0_49 = arith.constant 0 : index
    %c2_50 = arith.constant 2 : index
    %c1_51 = arith.constant 1 : index
    %c0_52 = arith.constant 0 : index
    %51 = vector.load %arg2[%c0_49, %c2_50, %c1_51, %c0_52] : memref<1x8x18x128xf32, #tpu.memory_space<vmem>>, vector<1x6x16x128xf32>
    %52 = vector.shape_cast %51 : vector<1x6x16x128xf32> to vector<6x16x128xf32>
    %53 = vector.shape_cast %52 : vector<6x16x128xf32> to vector<96x128xf32>
    %c7 = arith.constant 7 : index
    %c0_53 = arith.constant 0 : index
    %c0_54 = arith.constant 0 : index
    %54 = vector.load %arg3[%c7, %c0_53, %c0_54] : memref<9x128x128xf32, #tpu.memory_space<vmem>>, vector<1x128x128xf32>
    %55 = vector.shape_cast %54 : vector<1x128x128xf32> to vector<128x128xf32>
    %cst_55 = arith.constant dense<0.000000e+00> : vector<96x128xf32>
    %56 = tpu.matmul %53, %55, %cst_55 {dimension_numbers = #tpu.dot_dimension_numbers<[1], [0], [0], [1], [0, 0, 1, 1], [], []>} : vector<96x128xf32>, vector<128x128xf32>, vector<96x128xf32> -> vector<96x128xf32>
    %57 = arith.addf %50, %56 : vector<96x128xf32>
    %c0_56 = arith.constant 0 : index
    %c2_57 = arith.constant 2 : index
    %c2_58 = arith.constant 2 : index
    %c0_59 = arith.constant 0 : index
    %58 = vector.load %arg2[%c0_56, %c2_57, %c2_58, %c0_59] : memref<1x8x18x128xf32, #tpu.memory_space<vmem>>, vector<1x6x16x128xf32>
    %59 = vector.shape_cast %58 : vector<1x6x16x128xf32> to vector<6x16x128xf32>
    %60 = vector.shape_cast %59 : vector<6x16x128xf32> to vector<96x128xf32>
    %c8 = arith.constant 8 : index
    %c0_60 = arith.constant 0 : index
    %c0_61 = arith.constant 0 : index
    %61 = vector.load %arg3[%c8, %c0_60, %c0_61] : memref<9x128x128xf32, #tpu.memory_space<vmem>>, vector<1x128x128xf32>
    %62 = vector.shape_cast %61 : vector<1x128x128xf32> to vector<128x128xf32>
    %cst_62 = arith.constant dense<0.000000e+00> : vector<96x128xf32>
    %63 = tpu.matmul %60, %62, %cst_62 {dimension_numbers = #tpu.dot_dimension_numbers<[1], [0], [0], [1], [0, 0, 1, 1], [], []>} : vector<96x128xf32>, vector<128x128xf32>, vector<96x128xf32> -> vector<96x128xf32>
    %64 = arith.addf %57, %63 : vector<96x128xf32>
    %c3_i32 = arith.constant 3 : i32
    %65 = arith.muli %arg0, %c3_i32 : i32
    %66 = arith.addi %65, %arg1 : i32
    %c3_i32_63 = arith.constant 3 : i32
    %67 = arith.remsi %66, %c3_i32_63 : i32
    %c6_i32 = arith.constant 6 : i32
    %68 = arith.muli %67, %c6_i32 : i32
    %c16_i32 = arith.constant 16 : i32
    %69 = arith.subi %c16_i32, %68 : i32
    %c16_i32_64 = arith.constant 16 : i32
    %70 = arith.muli %69, %c16_i32_64 : i32
    %71 = tpu.iota {dimensions = array<i32: 0>} : vector<96x1xi32>
    %72 = vector.broadcast %70 : i32 to vector<96x1xi32>
    %73 = arith.cmpi slt, %71, %72 : vector<96x1xi32>
    %cst_65 = arith.constant 0.000000e+00 : f32
    %74 = vector.shape_cast %73 : vector<96x1xi1> to vector<96x1xi1>
    %75 = vector.broadcast %74 : vector<96x1xi1> to vector<96x128xi1>
    %76 = vector.broadcast %cst_65 : f32 to vector<96x128xf32>
    %77 = arith.select %75, %64, %76 : vector<96x128xi1>, vector<96x128xf32>
    %c0_66 = arith.constant 0 : index
    %c0_67 = arith.constant 0 : index
    %c0_68 = arith.constant 0 : index
    %78 = vector.load %arg4[%c0_66, %c0_67, %c0_68] : memref<1x2x128xf32, #tpu.memory_space<vmem>>, vector<1x1x128xf32>
    %79 = vector.shape_cast %78 : vector<1x1x128xf32> to vector<1x128xf32>
    %cst_69 = arith.constant dense<0.000000e+00> : vector<128xf32>
    %80 = vector.multi_reduction <add>, %77, %cst_69 [0] : vector<96x128xf32> to vector<128xf32>
    %81 = vector.shape_cast %80 : vector<128xf32> to vector<1x128xf32>
    %82 = arith.addf %79, %81 : vector<1x128xf32>
    %c0_70 = arith.constant 0 : index
    %c0_71 = arith.constant 0 : index
    %c0_72 = arith.constant 0 : index
    %83 = vector.load %arg4[%c0_70, %c0_71, %c0_72] : memref<1x2x128xf32, #tpu.memory_space<vmem>>, vector<1x1x128xf32>
    %84 = vector.shape_cast %83 : vector<1x1x128xf32> to vector<1x128xf32>
    %85 = vector.shape_cast %82 : vector<1x128xf32> to vector<1x1x128xf32>
    tpu.vector_store %arg4[%c0_70, %c0_71, %c0_72], %85 {strides = array<i32>} : memref<1x2x128xf32, #tpu.memory_space<vmem>>, vector<1x1x128xf32>,
    %c0_73 = arith.constant 0 : index
    %c1_74 = arith.constant 1 : index
    %c0_75 = arith.constant 0 : index
    %86 = vector.load %arg4[%c0_73, %c1_74, %c0_75] : memref<1x2x128xf32, #tpu.memory_space<vmem>>, vector<1x1x128xf32>
    %87 = vector.shape_cast %86 : vector<1x1x128xf32> to vector<1x128xf32>
    %88 = arith.mulf %77, %77 : vector<96x128xf32>
    %cst_76 = arith.constant dense<0.000000e+00> : vector<128xf32>
    %89 = vector.multi_reduction <add>, %88, %cst_76 [0] : vector<96x128xf32> to vector<128xf32>
    %90 = vector.shape_cast %89 : vector<128xf32> to vector<1x128xf32>
    %91 = arith.addf %87, %90 : vector<1x128xf32>
    %c0_77 = arith.constant 0 : index
    %c1_78 = arith.constant 1 : index
    %c0_79 = arith.constant 0 : index
    %92 = vector.load %arg4[%c0_77, %c1_78, %c0_79] : memref<1x2x128xf32, #tpu.memory_space<vmem>>, vector<1x1x128xf32>
    %93 = vector.shape_cast %92 : vector<1x1x128xf32> to vector<1x128xf32>
    %94 = vector.shape_cast %91 : vector<1x128xf32> to vector<1x1x128xf32>
    tpu.vector_store %arg4[%c0_77, %c1_78, %c0_79], %94 {strides = array<i32>} : memref<1x2x128xf32, #tpu.memory_space<vmem>>, vector<1x1x128xf32>,
    return
  }
  func.func @transform_0(%arg0: i32, %arg1: i32) -> (i32, i32, i32, i32) {
    %c3_i32 = arith.constant 3 : i32
    %0 = arith.muli %arg0, %c3_i32 : i32
    %1 = arith.addi %0, %arg1 : i32
    %c0_i32 = arith.constant 0 : i32
    %c0_i32_0 = arith.constant 0 : i32
    %c0_i32_1 = arith.constant 0 : i32
    %c0_i32_2 = arith.constant 0 : i32
    return %1, %c0_i32, %c0_i32_0, %c0_i32_1 : i32, i32, i32, i32
  }
  func.func @transform_1(%arg0: i32, %arg1: i32) -> (i32, i32, i32) {
    %c0_i32 = arith.constant 0 : i32
    %c0_i32_0 = arith.constant 0 : i32
    %c0_i32_1 = arith.constant 0 : i32
    %c0_i32_2 = arith.constant 0 : i32
    return %c0_i32, %c0_i32_0, %c0_i32_1 : i32, i32, i32
  }
  func.func @transform_2(%arg0: i32, %arg1: i32) -> (i32, i32, i32) {
    %c0_i32 = arith.constant 0 : i32
    %c0_i32_0 = arith.constant 0 : i32
    %c0_i32_1 = arith.constant 0 : i32
    return %arg0, %c0_i32, %c0_i32_0 : i32, i32, i32
  }
}

module attributes {stable_mosaic.version = 11 : i64} {
  func.func @kernel(%arg0: i32, %arg1: memref<1x8x18x128xf32, #tpu.memory_space<vmem>>, %arg2: memref<9x128x128xf32, #tpu.memory_space<vmem>>, %arg3: memref<2x128xf32, #tpu.memory_space<vmem>>, %arg4: memref<96x128xf32, #tpu.memory_space<vmem>>) attributes {dimension_semantics = [#tpu.dimension_semantics<parallel>], iteration_bounds = array<i64: 6>, scalar_prefetch = 0 : i64, scratch_operands = 0 : i64, tpu.core_type = #tpu.core_type<tc>, window_params = [{transform_indices = @transform_0, window_bounds = array<i64: 1, 8, 18, 128>}, {pipeline_mode = #tpu.pipeline_mode<synchronous>, transform_indices = @transform_1, window_bounds = array<i64: 9, 128, 128>}, {pipeline_mode = #tpu.pipeline_mode<synchronous>, transform_indices = @transform_2, window_bounds = array<i64: 2, 128>}, {transform_indices = @transform_3, window_bounds = array<i64: 96, 128>}]} {
    %c0 = arith.constant 0 : index
    %c0_0 = arith.constant 0 : index
    %c0_1 = arith.constant 0 : index
    %c0_2 = arith.constant 0 : index
    %0 = vector.load %arg1[%c0, %c0_0, %c0_1, %c0_2] : memref<1x8x18x128xf32, #tpu.memory_space<vmem>>, vector<1x6x16x128xf32>
    %1 = vector.shape_cast %0 : vector<1x6x16x128xf32> to vector<6x16x128xf32>
    %2 = vector.shape_cast %1 : vector<6x16x128xf32> to vector<96x128xf32>
    %c0_3 = arith.constant 0 : index
    %c0_4 = arith.constant 0 : index
    %c0_5 = arith.constant 0 : index
    %3 = vector.load %arg2[%c0_3, %c0_4, %c0_5] : memref<9x128x128xf32, #tpu.memory_space<vmem>>, vector<1x128x128xf32>
    %4 = vector.shape_cast %3 : vector<1x128x128xf32> to vector<128x128xf32>
    %cst = arith.constant dense<0.000000e+00> : vector<96x128xf32>
    %5 = tpu.matmul %2, %4, %cst {dimension_numbers = #tpu.dot_dimension_numbers<[1], [0], [0], [1], [0, 0, 1, 1], [], []>} : vector<96x128xf32>, vector<128x128xf32>, vector<96x128xf32> -> vector<96x128xf32>
    %c0_6 = arith.constant 0 : index
    %c0_7 = arith.constant 0 : index
    %c1 = arith.constant 1 : index
    %c0_8 = arith.constant 0 : index
    %6 = vector.load %arg1[%c0_6, %c0_7, %c1, %c0_8] : memref<1x8x18x128xf32, #tpu.memory_space<vmem>>, vector<1x6x16x128xf32>
    %7 = vector.shape_cast %6 : vector<1x6x16x128xf32> to vector<6x16x128xf32>
    %8 = vector.shape_cast %7 : vector<6x16x128xf32> to vector<96x128xf32>
    %c1_9 = arith.constant 1 : index
    %c0_10 = arith.constant 0 : index
    %c0_11 = arith.constant 0 : index
    %9 = vector.load %arg2[%c1_9, %c0_10, %c0_11] : memref<9x128x128xf32, #tpu.memory_space<vmem>>, vector<1x128x128xf32>
    %10 = vector.shape_cast %9 : vector<1x128x128xf32> to vector<128x128xf32>
    %cst_12 = arith.constant dense<0.000000e+00> : vector<96x128xf32>
    %11 = tpu.matmul %8, %10, %cst_12 {dimension_numbers = #tpu.dot_dimension_numbers<[1], [0], [0], [1], [0, 0, 1, 1], [], []>} : vector<96x128xf32>, vector<128x128xf32>, vector<96x128xf32> -> vector<96x128xf32>
    %12 = arith.addf %5, %11 : vector<96x128xf32>
    %c0_13 = arith.constant 0 : index
    %c0_14 = arith.constant 0 : index
    %c2 = arith.constant 2 : index
    %c0_15 = arith.constant 0 : index
    %13 = vector.load %arg1[%c0_13, %c0_14, %c2, %c0_15] : memref<1x8x18x128xf32, #tpu.memory_space<vmem>>, vector<1x6x16x128xf32>
    %14 = vector.shape_cast %13 : vector<1x6x16x128xf32> to vector<6x16x128xf32>
    %15 = vector.shape_cast %14 : vector<6x16x128xf32> to vector<96x128xf32>
    %c2_16 = arith.constant 2 : index
    %c0_17 = arith.constant 0 : index
    %c0_18 = arith.constant 0 : index
    %16 = vector.load %arg2[%c2_16, %c0_17, %c0_18] : memref<9x128x128xf32, #tpu.memory_space<vmem>>, vector<1x128x128xf32>
    %17 = vector.shape_cast %16 : vector<1x128x128xf32> to vector<128x128xf32>
    %cst_19 = arith.constant dense<0.000000e+00> : vector<96x128xf32>
    %18 = tpu.matmul %15, %17, %cst_19 {dimension_numbers = #tpu.dot_dimension_numbers<[1], [0], [0], [1], [0, 0, 1, 1], [], []>} : vector<96x128xf32>, vector<128x128xf32>, vector<96x128xf32> -> vector<96x128xf32>
    %19 = arith.addf %12, %18 : vector<96x128xf32>
    %c0_20 = arith.constant 0 : index
    %c1_21 = arith.constant 1 : index
    %c0_22 = arith.constant 0 : index
    %c0_23 = arith.constant 0 : index
    %20 = vector.load %arg1[%c0_20, %c1_21, %c0_22, %c0_23] : memref<1x8x18x128xf32, #tpu.memory_space<vmem>>, vector<1x6x16x128xf32>
    %21 = vector.shape_cast %20 : vector<1x6x16x128xf32> to vector<6x16x128xf32>
    %22 = vector.shape_cast %21 : vector<6x16x128xf32> to vector<96x128xf32>
    %c3 = arith.constant 3 : index
    %c0_24 = arith.constant 0 : index
    %c0_25 = arith.constant 0 : index
    %23 = vector.load %arg2[%c3, %c0_24, %c0_25] : memref<9x128x128xf32, #tpu.memory_space<vmem>>, vector<1x128x128xf32>
    %24 = vector.shape_cast %23 : vector<1x128x128xf32> to vector<128x128xf32>
    %cst_26 = arith.constant dense<0.000000e+00> : vector<96x128xf32>
    %25 = tpu.matmul %22, %24, %cst_26 {dimension_numbers = #tpu.dot_dimension_numbers<[1], [0], [0], [1], [0, 0, 1, 1], [], []>} : vector<96x128xf32>, vector<128x128xf32>, vector<96x128xf32> -> vector<96x128xf32>
    %26 = arith.addf %19, %25 : vector<96x128xf32>
    %c0_27 = arith.constant 0 : index
    %c1_28 = arith.constant 1 : index
    %c1_29 = arith.constant 1 : index
    %c0_30 = arith.constant 0 : index
    %27 = vector.load %arg1[%c0_27, %c1_28, %c1_29, %c0_30] : memref<1x8x18x128xf32, #tpu.memory_space<vmem>>, vector<1x6x16x128xf32>
    %28 = vector.shape_cast %27 : vector<1x6x16x128xf32> to vector<6x16x128xf32>
    %29 = vector.shape_cast %28 : vector<6x16x128xf32> to vector<96x128xf32>
    %c4 = arith.constant 4 : index
    %c0_31 = arith.constant 0 : index
    %c0_32 = arith.constant 0 : index
    %30 = vector.load %arg2[%c4, %c0_31, %c0_32] : memref<9x128x128xf32, #tpu.memory_space<vmem>>, vector<1x128x128xf32>
    %31 = vector.shape_cast %30 : vector<1x128x128xf32> to vector<128x128xf32>
    %cst_33 = arith.constant dense<0.000000e+00> : vector<96x128xf32>
    %32 = tpu.matmul %29, %31, %cst_33 {dimension_numbers = #tpu.dot_dimension_numbers<[1], [0], [0], [1], [0, 0, 1, 1], [], []>} : vector<96x128xf32>, vector<128x128xf32>, vector<96x128xf32> -> vector<96x128xf32>
    %33 = arith.addf %26, %32 : vector<96x128xf32>
    %c0_34 = arith.constant 0 : index
    %c1_35 = arith.constant 1 : index
    %c2_36 = arith.constant 2 : index
    %c0_37 = arith.constant 0 : index
    %34 = vector.load %arg1[%c0_34, %c1_35, %c2_36, %c0_37] : memref<1x8x18x128xf32, #tpu.memory_space<vmem>>, vector<1x6x16x128xf32>
    %35 = vector.shape_cast %34 : vector<1x6x16x128xf32> to vector<6x16x128xf32>
    %36 = vector.shape_cast %35 : vector<6x16x128xf32> to vector<96x128xf32>
    %c5 = arith.constant 5 : index
    %c0_38 = arith.constant 0 : index
    %c0_39 = arith.constant 0 : index
    %37 = vector.load %arg2[%c5, %c0_38, %c0_39] : memref<9x128x128xf32, #tpu.memory_space<vmem>>, vector<1x128x128xf32>
    %38 = vector.shape_cast %37 : vector<1x128x128xf32> to vector<128x128xf32>
    %cst_40 = arith.constant dense<0.000000e+00> : vector<96x128xf32>
    %39 = tpu.matmul %36, %38, %cst_40 {dimension_numbers = #tpu.dot_dimension_numbers<[1], [0], [0], [1], [0, 0, 1, 1], [], []>} : vector<96x128xf32>, vector<128x128xf32>, vector<96x128xf32> -> vector<96x128xf32>
    %40 = arith.addf %33, %39 : vector<96x128xf32>
    %c0_41 = arith.constant 0 : index
    %c2_42 = arith.constant 2 : index
    %c0_43 = arith.constant 0 : index
    %c0_44 = arith.constant 0 : index
    %41 = vector.load %arg1[%c0_41, %c2_42, %c0_43, %c0_44] : memref<1x8x18x128xf32, #tpu.memory_space<vmem>>, vector<1x6x16x128xf32>
    %42 = vector.shape_cast %41 : vector<1x6x16x128xf32> to vector<6x16x128xf32>
    %43 = vector.shape_cast %42 : vector<6x16x128xf32> to vector<96x128xf32>
    %c6 = arith.constant 6 : index
    %c0_45 = arith.constant 0 : index
    %c0_46 = arith.constant 0 : index
    %44 = vector.load %arg2[%c6, %c0_45, %c0_46] : memref<9x128x128xf32, #tpu.memory_space<vmem>>, vector<1x128x128xf32>
    %45 = vector.shape_cast %44 : vector<1x128x128xf32> to vector<128x128xf32>
    %cst_47 = arith.constant dense<0.000000e+00> : vector<96x128xf32>
    %46 = tpu.matmul %43, %45, %cst_47 {dimension_numbers = #tpu.dot_dimension_numbers<[1], [0], [0], [1], [0, 0, 1, 1], [], []>} : vector<96x128xf32>, vector<128x128xf32>, vector<96x128xf32> -> vector<96x128xf32>
    %47 = arith.addf %40, %46 : vector<96x128xf32>
    %c0_48 = arith.constant 0 : index
    %c2_49 = arith.constant 2 : index
    %c1_50 = arith.constant 1 : index
    %c0_51 = arith.constant 0 : index
    %48 = vector.load %arg1[%c0_48, %c2_49, %c1_50, %c0_51] : memref<1x8x18x128xf32, #tpu.memory_space<vmem>>, vector<1x6x16x128xf32>
    %49 = vector.shape_cast %48 : vector<1x6x16x128xf32> to vector<6x16x128xf32>
    %50 = vector.shape_cast %49 : vector<6x16x128xf32> to vector<96x128xf32>
    %c7 = arith.constant 7 : index
    %c0_52 = arith.constant 0 : index
    %c0_53 = arith.constant 0 : index
    %51 = vector.load %arg2[%c7, %c0_52, %c0_53] : memref<9x128x128xf32, #tpu.memory_space<vmem>>, vector<1x128x128xf32>
    %52 = vector.shape_cast %51 : vector<1x128x128xf32> to vector<128x128xf32>
    %cst_54 = arith.constant dense<0.000000e+00> : vector<96x128xf32>
    %53 = tpu.matmul %50, %52, %cst_54 {dimension_numbers = #tpu.dot_dimension_numbers<[1], [0], [0], [1], [0, 0, 1, 1], [], []>} : vector<96x128xf32>, vector<128x128xf32>, vector<96x128xf32> -> vector<96x128xf32>
    %54 = arith.addf %47, %53 : vector<96x128xf32>
    %c0_55 = arith.constant 0 : index
    %c2_56 = arith.constant 2 : index
    %c2_57 = arith.constant 2 : index
    %c0_58 = arith.constant 0 : index
    %55 = vector.load %arg1[%c0_55, %c2_56, %c2_57, %c0_58] : memref<1x8x18x128xf32, #tpu.memory_space<vmem>>, vector<1x6x16x128xf32>
    %56 = vector.shape_cast %55 : vector<1x6x16x128xf32> to vector<6x16x128xf32>
    %57 = vector.shape_cast %56 : vector<6x16x128xf32> to vector<96x128xf32>
    %c8 = arith.constant 8 : index
    %c0_59 = arith.constant 0 : index
    %c0_60 = arith.constant 0 : index
    %58 = vector.load %arg2[%c8, %c0_59, %c0_60] : memref<9x128x128xf32, #tpu.memory_space<vmem>>, vector<1x128x128xf32>
    %59 = vector.shape_cast %58 : vector<1x128x128xf32> to vector<128x128xf32>
    %cst_61 = arith.constant dense<0.000000e+00> : vector<96x128xf32>
    %60 = tpu.matmul %57, %59, %cst_61 {dimension_numbers = #tpu.dot_dimension_numbers<[1], [0], [0], [1], [0, 0, 1, 1], [], []>} : vector<96x128xf32>, vector<128x128xf32>, vector<96x128xf32> -> vector<96x128xf32>
    %61 = arith.addf %54, %60 : vector<96x128xf32>
    %c0_62 = arith.constant 0 : index
    %c0_63 = arith.constant 0 : index
    %62 = vector.load %arg3[%c0_62, %c0_63] : memref<2x128xf32, #tpu.memory_space<vmem>>, vector<1x128xf32>
    %63 = vector.broadcast %62 : vector<1x128xf32> to vector<96x128xf32>
    %64 = arith.mulf %61, %63 : vector<96x128xf32>
    %c1_64 = arith.constant 1 : index
    %c0_65 = arith.constant 0 : index
    %65 = vector.load %arg3[%c1_64, %c0_65] : memref<2x128xf32, #tpu.memory_space<vmem>>, vector<1x128xf32>
    %66 = vector.broadcast %65 : vector<1x128xf32> to vector<96x128xf32>
    %67 = arith.addf %64, %66 : vector<96x128xf32>
    %cst_66 = arith.constant 0.000000e+00 : f32
    %68 = vector.broadcast %cst_66 : f32 to vector<96x128xf32>
    %69 = arith.maximumf %67, %68 : vector<96x128xf32>
    %c0_67 = arith.constant 0 : index
    %c0_68 = arith.constant 0 : index
    %70 = vector.load %arg4[%c0_67, %c0_68] : memref<96x128xf32, #tpu.memory_space<vmem>>, vector<96x128xf32>
    tpu.vector_store %arg4[%c0_67, %c0_68], %69 {strides = array<i32>} : memref<96x128xf32, #tpu.memory_space<vmem>>, vector<96x128xf32>,
    return
  }
  func.func @transform_0(%arg0: i32) -> (i32, i32, i32, i32) {
    %c0_i32 = arith.constant 0 : i32
    %c0_i32_0 = arith.constant 0 : i32
    %c0_i32_1 = arith.constant 0 : i32
    %c0_i32_2 = arith.constant 0 : i32
    return %arg0, %c0_i32, %c0_i32_0, %c0_i32_1 : i32, i32, i32, i32
  }
  func.func @transform_1(%arg0: i32) -> (i32, i32, i32) {
    %c0_i32 = arith.constant 0 : i32
    %c0_i32_0 = arith.constant 0 : i32
    %c0_i32_1 = arith.constant 0 : i32
    %c0_i32_2 = arith.constant 0 : i32
    return %c0_i32, %c0_i32_0, %c0_i32_1 : i32, i32, i32
  }
  func.func @transform_2(%arg0: i32) -> (i32, i32) {
    %c0_i32 = arith.constant 0 : i32
    %c0_i32_0 = arith.constant 0 : i32
    %c0_i32_1 = arith.constant 0 : i32
    return %c0_i32, %c0_i32_0 : i32, i32
  }
  func.func @transform_3(%arg0: i32) -> (i32, i32) {
    %c0_i32 = arith.constant 0 : i32
    %c0_i32_0 = arith.constant 0 : i32
    return %arg0, %c0_i32 : i32, i32
  }
}

</mosaic_0001>

<llo_original>
// kernel: conv_module_ex.2
$region0: #{conv_module_ex.2}
  #allocation0 [shape = 'u32[]', space=smem, size = 0x4, offset = 0x4, fixed_abs, tag = 'smem constant byte address 0x4 - core index']
  #allocation1 [shape = 'u32[72,128]{1,0:T(1,128)}', space=vmem, size = 0x9000, scoped, tag = 'internal scratch']
  %s0 = inlined_call_operand.vmem [shape: f32[6,8,18,128], index: 0, kind: input, shape index: {}]
  %s1 = inlined_call_operand.vmem [shape: f32[9,128,128], index: 1, kind: input, shape index: {}]
  %s2 = inlined_call_operand.vmem [shape: f32[2,2,128], index: 2, kind: output, shape index: {}]
  %s3 = sld [smem:[#allocation0]]
  $region45: #{conv_module_ex.2} parent=0
    _
  %s5 = ssub.s32 1, %s3
  %s6 = scalar_select 0, %s5, %s3
  loop: start=0, step=1, limit=8
  $region2: #{conv_module_ex.2} parent=0 // loop_pre_header
    _
  $region3: #{conv_module_ex.2} parent=0 // loop_header
    %s8 = sphi 0, %s12
    %p9 = scmp.ge.s32.totalorder %s8, 8
    %s15 = sphi 0, %s27
    %s16 = sphi 0, %s23
    %s17 = sphi 0, %s15
    %s18 = sphi 0, %s16
    %s19 = sphi 0, %s17
    %s20 = sphi 0, %s18
    %s34 = sphi 0, %s36
    %s37 = sphi 0, %s34
    %s38 = sphi 0, %s37
    %s54 = sphi 0, %s38
    %s58 = sphi 0, %s58
    %s60 = sphi 0, %s58
    %s61 = sphi 0, %s60
    %s75 = sphi 0, %s61
    %s81 = sphi 0, %s83
    %s84 = sphi 0, %s81
    %s85 = sphi 0, %s84
    %s101 = sphi 0, %s85
  $region4: #{conv_module_ex.2} parent=0 // loop_header_branch
    %11 = sbr.rel (%p9) target = $region8
  $region5: #{conv_module_ex.2} parent=0 // loop_body
    %s13 = ssub.s32 %s8, 1
    %s14 = ssub.s32 %s8, 2
    %s21 = sadd.s32 1, %s16
    %p22 = scmp.ge.s32.totalorder %s21, 3
    %s23 = scalar_select %p22, 0, %s21
    %s24 = sadd.s32 1, %s15
    %s25 = scalar_select %p22, %s24, %s15
    %p26 = scmp.ge.s32.totalorder %s25, 2
    %s27 = scalar_select %p26, 0, %s25
    %s28 = smul.u32 %s15, 3
    %s29 = sadd.s32 %s28, %s16
    %s30 = smul.u32 %s27, 3
    %s31 = sadd.s32 %s30, %s23
    %s32 = ssub.s32 %s29, %s31
    %p33 = scmp.eq.s32.totalorder %s32, 0
    %s35 = sadd.s32 %s34, 1
    %s36 = scalar_select %p33, %s34, %s35
    %p39 = pneg %p33
    %p40 = scmp.eq.s32.totalorder %s8, 5
    %p41 = por %p39, %p40
    %p42 = scmp.ne.s32.totalorder %s34, %s37
    %p43 = scmp.eq.s32.totalorder %s8, 0
    %p44 = por %p42, %p43
    %p45 = scmp.ne.s32.totalorder %s34, %s37
    %p46 = scmp.eq.s32.totalorder %s13, 5
    %p47 = por %p45, %p46
    %p48 = scmp.ne.s32.totalorder %s37, %s38
    %p49 = scmp.eq.s32.totalorder %s13, 0
    %p50 = por %p48, %p49
    %p51 = scmp.ne.s32.totalorder %s37, %s38
    %p52 = scmp.eq.s32.totalorder %s14, 5
    %p53 = por %p51, %p52
    %p55 = scmp.ne.s32.totalorder %s38, %s54
    %p56 = scmp.eq.s32.totalorder %s14, 0
    %p57 = por %p55, %p56
    %s59 = sadd.s32 %s58, 1
    %p62 = scmp.eq.s32.totalorder %s8, 5
    %p63 = scmp.ne.s32.totalorder %s58, %s60
    %p64 = scmp.eq.s32.totalorder %s8, 0
    %p65 = por %p63, %p64
    %p66 = scmp.ne.s32.totalorder %s58, %s60
    %p67 = scmp.eq.s32.totalorder %s13, 5
    %p68 = por %p66, %p67
    %p69 = scmp.ne.s32.totalorder %s60, %s61
    %p70 = scmp.eq.s32.totalorder %s13, 0
    %p71 = por %p69, %p70
    %p72 = scmp.ne.s32.totalorder %s60, %s61
    %p73 = scmp.eq.s32.totalorder %s14, 5
    %p74 = por %p72, %p73
    %p76 = scmp.ne.s32.totalorder %s61, %s75
    %p77 = scmp.eq.s32.totalorder %s14, 0
    %p78 = por %p76, %p77
    %s79 = ssub.s32 %s15, %s27
    %p80 = scmp.eq.s32.totalorder %s79, 0
    %s82 = sadd.s32 %s81, 1
    %s83 = scalar_select %p80, %s81, %s82
    %p86 = pneg %p80
    %p87 = scmp.eq.s32.totalorder %s8, 5
    %p88 = por %p86, %p87
    %p89 = scmp.ne.s32.totalorder %s81, %s84
    %p90 = scmp.eq.s32.totalorder %s8, 0
    %p91 = por %p89, %p90
    %p92 = scmp.ne.s32.totalorder %s81, %s84
    %p93 = scmp.eq.s32.totalorder %s13, 5
    %p94 = por %p92, %p93
    %p95 = scmp.ne.s32.totalorder %s84, %s85
    %p96 = scmp.eq.s32.totalorder %s13, 0
    %p97 = por %p95, %p96
    %p98 = scmp.ne.s32.totalorder %s84, %s85
    %p99 = scmp.eq.s32.totalorder %s14, 5
    %p100 = por %p98, %p99
    %p102 = scmp.ne.s32.totalorder %s85, %s101
    %p103 = scmp.eq.s32.totalorder %s14, 0
    %p104 = por %p102, %p103
    %p105 = scmp.le.s32.totalorder 1, %s8
    %p106 = scmp.lt.s32.totalorder %s8, 7
    %p107 = pnand %p105, %p106
    %p108 = pneg %p107
    // Predicated region
    $region9: #{conv_module_ex.2} parent=5 // pred_check
      _
    $region10: #{conv_module_ex.2} parent=5 // pred_check_branch
      %110 = sbr.rel (%p107) target = $region12
    $region11: #{conv_module_ex.2} parent=5 // pred_region
      %s111 = ssub.s32 %s8, 1
      // Predicated region
      $region13: #{conv_module_ex.2} parent=11 // pred_check
        %p112 = pneg %p71
      $region14: #{conv_module_ex.2} parent=11 // pred_check_branch
        %114 = sbr.rel (%p112) target = $region16
      $region15: #{conv_module_ex.2} parent=11 // pred_region
        _
      $region16: #{conv_module_ex.2} parent=11 // pred_fallthru
        _
    $region12: #{conv_module_ex.2} parent=5 // pred_fallthru
      _
    %p115 = scmp.lt.s32.totalorder %s8, 6
    // Predicated region
    $region17: #{conv_module_ex.2} parent=5 // pred_check
      %p116 = pneg %p115
    $region18: #{conv_module_ex.2} parent=5 // pred_check_branch
      %118 = sbr.rel (%p116) target = $region20
    $region19: #{conv_module_ex.2} parent=5 // pred_region
      // Predicated region
      $region21: #{conv_module_ex.2} parent=19 // pred_check
        %p119 = pneg %p44
      $region22: #{conv_module_ex.2} parent=19 // pred_check_branch
        %121 = sbr.rel (%p119) target = $region24
      $region23: #{conv_module_ex.2} parent=19 // pred_region
        %s122 = smul.u32 %s15, 3
        %s123 = sadd.s32 %s122, %s16
        %p124 = scmp.lt.s32.totalorder %s123, 5
        %s125 = scalar_select %p124, %s123, 5
        %s126 = smul.addr %s125, 24
        %s127 = smul.addr %s126, 8
        %s128 = scalar_lea.vmem %s0, %s127
        %s129 = smul.u32 %s15, 3
        %s130 = sadd.s32 %s129, %s16
      $region24: #{conv_module_ex.2} parent=19 // pred_fallthru
        _
    $region20: #{conv_module_ex.2} parent=5 // pred_fallthru
      _
    %p131 = scmp.le.s32.totalorder 1, %s8
    %p132 = scmp.lt.s32.totalorder %s8, 7
    %p133 = pnand %p131, %p132
    %p134 = pneg %p133
    // Predicated region
    $region25: #{conv_module_ex.2} parent=5 // pred_check
      _
    $region26: #{conv_module_ex.2} parent=5 // pred_check_branch
      %136 = sbr.rel (%p133) target = $region28
    $region27: #{conv_module_ex.2} parent=5 // pred_region
      %s137 = ssub.s32 %s8, 1
      %s138 = smul.u32 %s17, 3
      %s139 = sadd.s32 %s138, %s18
      %p140 = scmp.lt.s32.totalorder %s139, 5
      %s141 = scalar_select %p140, %s139, 5
      %s142 = smul.addr %s141, 24
      %s143 = smul.addr %s142, 8
      %s144 = scalar_lea.vmem %s0, %s143
      %p145 = pneg %p50
      %p146 = pneg %p47
      %p147 = pneg %p71
      %p148 = pneg %p68
      %p149 = pneg %p97
      %p150 = pneg %p94
      %p151 = scmp.lt.s32.totalorder %s17, 1
      %s152 = scalar_select %p151, %s17, 1
      %s153 = smul.addr %s152, 2
      %s154 = scalar_lea.vmem %s2, %s153
      %s155 = smul.u32 %s17, 3
      %s156 = sadd.s32 %s155, %s18
      %p157 = scmp.lt.s32.totalorder %s156, 5
      %s158 = scalar_select %p157, %s156, 5
      %s159 = smul.addr %s158, 24
      %s160 = smul.addr %s159, 8
      %s161 = scalar_lea.vmem %s0, %s160
      %s162 = smul.u32 %s17, 3
      %s163 = sadd.s32 %s162, %s18
      %p164 = scmp.lt.s32.totalorder %s17, 1
      %s165 = scalar_select %p164, %s17, 1
      %s166 = smul.addr %s165, 2
      %s167 = scalar_lea.vmem %s2, %s166
      %p168 = scmp.eq.s32.totalorder %s18, 0
      // Predicated region
      $region29: #{conv_module_ex.2} parent=27 // pred_check
        %p169 = pneg %p168
      $region30: #{conv_module_ex.2} parent=27 // pred_check_branch
        %171 = sbr.rel (%p169) target = $region32
      $region31: #{conv_module_ex.2} parent=27 // pred_region
        %172 = vst [vmem:[%s167] sm:$0x3] 0.0
      $region32: #{conv_module_ex.2} parent=27 // pred_fallthru
        _
      %v173 = vld [vmem:[%s161] sm:$0xff]
      %v174 = vld [vmem:[%s161 + $0x8] sm:$0xff]
      %v175 = vld [vmem:[%s161 + $0x18] sm:$0xff]
      %v176 = vld [vmem:[%s161 + $0x20] sm:$0xff]
      %v177 = vld [vmem:[%s161 + $0x30] sm:$0xff]
      %v178 = vld [vmem:[%s161 + $0x38] sm:$0xff]
      %v179 = vld [vmem:[%s161 + $0x48] sm:$0xff]
      %v180 = vld [vmem:[%s161 + $0x50] sm:$0xff]
      %v181 = vld [vmem:[%s161 + $0x60] sm:$0xff]
      %v182 = vld [vmem:[%s161 + $0x68] sm:$0xff]
      %v183 = vld [vmem:[%s161 + $0x78] sm:$0xff]
      %v184 = vld [vmem:[%s161 + $0x80] sm:$0xff]
      %v185 = vld [vmem:[%s1] sm:$0xff]
      %v186 = vld [vmem:[%s1 + $0x8] sm:$0xff]
      %v187 = vld [vmem:[%s1 + $0x10] sm:$0xff]
      %v188 = vld [vmem:[%s1 + $0x18] sm:$0xff]
      %v189 = vld [vmem:[%s1 + $0x20] sm:$0xff]
      %v190 = vld [vmem:[%s1 + $0x28] sm:$0xff]
      %v191 = vld [vmem:[%s1 + $0x30] sm:$0xff]
      %v192 = vld [vmem:[%s1 + $0x38] sm:$0xff]
      %v193 = vld [vmem:[%s1 + $0x40] sm:$0xff]
      %v194 = vld [vmem:[%s1 + $0x48] sm:$0xff]
      %v195 = vld [vmem:[%s1 + $0x50] sm:$0xff]
      %v196 = vld [vmem:[%s1 + $0x58] sm:$0xff]
      %v197 = vld [vmem:[%s1 + $0x60] sm:$0xff]
      %v198 = vld [vmem:[%s1 + $0x68] sm:$0xff]
      %v199 = vld [vmem:[%s1 + $0x70] sm:$0xff]
      %v200 = vld [vmem:[%s1 + $0x78] sm:$0xff]
      %v201 = vld [vmem:[%s161 + $0x1] sm:$0xff]
      %v202 = vld [vmem:[%s161 + $0x9] sm:$0xff]
      %v203 = vld [vmem:[%s161 + $0x19] sm:$0xff]
      %v204 = vld [vmem:[%s161 + $0x21] sm:$0xff]
      %v205 = vld [vmem:[%s161 + $0x31] sm:$0xff]
      %v206 = vld [vmem:[%s161 + $0x39] sm:$0xff]
      %v207 = vld [vmem:[%s161 + $0x49] sm:$0xff]
      %v208 = vld [vmem:[%s161 + $0x51] sm:$0xff]
      %v209 = vld [vmem:[%s161 + $0x61] sm:$0xff]
      %v210 = vld [vmem:[%s161 + $0x69] sm:$0xff]
      %v211 = vld [vmem:[%s161 + $0x79] sm:$0xff]
      %v212 = vld [vmem:[%s161 + $0x81] sm:$0xff]
      %s213 = scalar_lea.vmem %s1, 128
      %v214 = vld [vmem:[%s213] sm:$0xff]
      %v215 = vld [vmem:[%s213 + $0x8] sm:$0xff]
      %v216 = vld [vmem:[%s213 + $0x10] sm:$0xff]
      %v217 = vld [vmem:[%s213 + $0x18] sm:$0xff]
      %v218 = vld [vmem:[%s213 + $0x20] sm:$0xff]
      %v219 = vld [vmem:[%s213 + $0x28] sm:$0xff]
      %v220 = vld [vmem:[%s213 + $0x30] sm:$0xff]
      %v221 = vld [vmem:[%s213 + $0x38] sm:$0xff]
      %v222 = vld [vmem:[%s213 + $0x40] sm:$0xff]
      %v223 = vld [vmem:[%s213 + $0x48] sm:$0xff]
      %v224 = vld [vmem:[%s213 + $0x50] sm:$0xff]
      %v225 = vld [vmem:[%s213 + $0x58] sm:$0xff]
      %v226 = vld [vmem:[%s213 + $0x60] sm:$0xff]
      %v227 = vld [vmem:[%s213 + $0x68] sm:$0xff]
      %v228 = vld [vmem:[%s213 + $0x70] sm:$0xff]
      %v229 = vld [vmem:[%s213 + $0x78] sm:$0xff]
      %230 = vmatpush.msra.mxu0 %v229
      %231 = vmatpush.msra.mxu0 %v228
      %232 = vmatpush.msra.mxu0 %v227
      %233 = vmatpush.msra.mxu0 %v226
      %234 = vmatpush.msra.mxu0 %v225
      %235 = vmatpush.msra.mxu0 %v224
      %236 = vmatpush.msra.mxu0 %v223
      %237 = vmatpush.msra.mxu0 %v222
      %238 = vmatpush.msra.mxu0 %v221
      %239 = vmatpush.msra.mxu0 %v220
      %240 = vmatpush.msra.mxu0 %v219
      %241 = vmatpush.msra.mxu0 %v218
      %242 = vmatpush.msra.mxu0 %v217
      %243 = vmatpush.msra.mxu0 %v216
      %244 = vmatpush.msra.mxu0 %v215
      %245 = vmatpush.msra.mxu0 %v214
      %246 = vmatmul.f32.gmra.mxu0 %v201
      %v247 = vpop.f32.mrf.mxu0
      %v248 = vadd.f32 0.0, %v247
      %249 = vmatmul.f32.gmra.mxu0 %v202
      %v250 = vpop.f32.mrf.mxu0
      %v251 = vadd.f32 0.0, %v250
      %252 = vmatmul.f32.gmra.mxu0 %v203
      %v253 = vpop.f32.mrf.mxu0
      %v254 = vadd.f32 0.0, %v253
      %255 = vmatmul.f32.gmra.mxu0 %v204
      %v256 = vpop.f32.mrf.mxu0
      %v257 = vadd.f32 0.0, %v256
      %258 = vmatmul.f32.gmra.mxu0 %v205
      %v259 = vpop.f32.mrf.mxu0
      %v260 = vadd.f32 0.0, %v259
      %261 = vmatmul.f32.gmra.mxu0 %v206
      %v262 = vpop.f32.mrf.mxu0
      %v263 = vadd.f32 0.0, %v262
      %264 = vmatmul.f32.gmra.mxu0 %v207
      %v265 = vpop.f32.mrf.mxu0
      %v266 = vadd.f32 0.0, %v265
      %267 = vmatmul.f32.gmra.mxu0 %v208
      %v268 = vpop.f32.mrf.mxu0
      %v269 = vadd.f32 0.0, %v268
      %270 = vmatmul.f32.gmra.mxu0 %v209
      %v271 = vpop.f32.mrf.mxu0
      %v272 = vadd.f32 0.0, %v271
      %273 = vmatmul.f32.gmra.mxu0 %v210
      %v274 = vpop.f32.mrf.mxu0
      %v275 = vadd.f32 0.0, %v274
      %276 = vmatmul.f32.gmra.mxu0 %v211
      %v277 = vpop.f32.mrf.mxu0
      %v278 = vadd.f32 0.0, %v277
      %279 = vmatmul.f32.gmra.mxu0 %v212
      %v280 = vpop.f32.mrf.mxu0
      %v281 = vadd.f32 0.0, %v280
      %282 = vdwg.mxu0
      %283 = vmatpush.msra.mxu0 %v200
      %284 = vmatpush.msra.mxu0 %v199
      %285 = vmatpush.msra.mxu0 %v198
      %286 = vmatpush.msra.mxu0 %v197
      %287 = vmatpush.msra.mxu0 %v196
      %288 = vmatpush.msra.mxu0 %v195
      %289 = vmatpush.msra.mxu0 %v194
      %290 = vmatpush.msra.mxu0 %v193
      %291 = vmatpush.msra.mxu0 %v192
      %292 = vmatpush.msra.mxu0 %v191
      %293 = vmatpush.msra.mxu0 %v190
      %294 = vmatpush.msra.mxu0 %v189
      %295 = vmatpush.msra.mxu0 %v188
      %296 = vmatpush.msra.mxu0 %v187
      %297 = vmatpush.msra.mxu0 %v186
      %298 = vmatpush.msra.mxu0 %v185
      %299 = vmatmul.f32.gmra.mxu0 %v173
      %v300 = vpop.f32.mrf.mxu0
      %v301 = vadd.f32 %v248, %v300
      %302 = vmatmul.f32.gmra.mxu0 %v174
      %v303 = vpop.f32.mrf.mxu0
      %v304 = vadd.f32 %v251, %v303
      %305 = vmatmul.f32.gmra.mxu0 %v175
      %v306 = vpop.f32.mrf.mxu0
      %v307 = vadd.f32 %v254, %v306
      %308 = vmatmul.f32.gmra.mxu0 %v176
      %v309 = vpop.f32.mrf.mxu0
      %v310 = vadd.f32 %v257, %v309
      %311 = vmatmul.f32.gmra.mxu0 %v177
      %v312 = vpop.f32.mrf.mxu0
      %v313 = vadd.f32 %v260, %v312
      %314 = vmatmul.f32.gmra.mxu0 %v178
      %v315 = vpop.f32.mrf.mxu0
      %v316 = vadd.f32 %v263, %v315
      %317 = vmatmul.f32.gmra.mxu0 %v179
      %v318 = vpop.f32.mrf.mxu0
      %v319 = vadd.f32 %v266, %v318
      %320 = vmatmul.f32.gmra.mxu0 %v180
      %v321 = vpop.f32.mrf.mxu0
      %v322 = vadd.f32 %v269, %v321
      %323 = vmatmul.f32.gmra.mxu0 %v181
      %v324 = vpop.f32.mrf.mxu0
      %v325 = vadd.f32 %v272, %v324
      %326 = vmatmul.f32.gmra.mxu0 %v182
      %v327 = vpop.f32.mrf.mxu0
      %v328 = vadd.f32 %v275, %v327
      %329 = vmatmul.f32.gmra.mxu0 %v183
      %v330 = vpop.f32.mrf.mxu0
      %v331 = vadd.f32 %v278, %v330
      %332 = vmatmul.f32.gmra.mxu0 %v184
      %v333 = vpop.f32.mrf.mxu0
      %v334 = vadd.f32 %v281, %v333
      %335 = vdwg.mxu0
      %v336 = vld [vmem:[%s161 + $0x2] sm:$0xff]
      %v337 = vld [vmem:[%s161 + $0xa] sm:$0xff]
      %v338 = vld [vmem:[%s161 + $0x1a] sm:$0xff]
      %v339 = vld [vmem:[%s161 + $0x22] sm:$0xff]
      %v340 = vld [vmem:[%s161 + $0x32] sm:$0xff]
      %v341 = vld [vmem:[%s161 + $0x3a] sm:$0xff]
      %v342 = vld [vmem:[%s161 + $0x4a] sm:$0xff]
      %v343 = vld [vmem:[%s161 + $0x52] sm:$0xff]
      %v344 = vld [vmem:[%s161 + $0x62] sm:$0xff]
      %v345 = vld [vmem:[%s161 + $0x6a] sm:$0xff]
      %v346 = vld [vmem:[%s161 + $0x7a] sm:$0xff]
      %v347 = vld [vmem:[%s161 + $0x82] sm:$0xff]
      %s348 = scalar_lea.vmem %s1, 256
      %v349 = vld [vmem:[%s348] sm:$0xff]
      %v350 = vld [vmem:[%s348 + $0x8] sm:$0xff]
      %v351 = vld [vmem:[%s348 + $0x10] sm:$0xff]
      %v352 = vld [vmem:[%s348 + $0x18] sm:$0xff]
      %v353 = vld [vmem:[%s348 + $0x20] sm:$0xff]
      %v354 = vld [vmem:[%s348 + $0x28] sm:$0xff]
      %v355 = vld [vmem:[%s348 + $0x30] sm:$0xff]
      %v356 = vld [vmem:[%s348 + $0x38] sm:$0xff]
      %v357 = vld [vmem:[%s348 + $0x40] sm:$0xff]
      %v358 = vld [vmem:[%s348 + $0x48] sm:$0xff]
      %v359 = vld [vmem:[%s348 + $0x50] sm:$0xff]
      %v360 = vld [vmem:[%s348 + $0x58] sm:$0xff]
      %v361 = vld [vmem:[%s348 + $0x60] sm:$0xff]
      %v362 = vld [vmem:[%s348 + $0x68] sm:$0xff]
      %v363 = vld [vmem:[%s348 + $0x70] sm:$0xff]
      %v364 = vld [vmem:[%s348 + $0x78] sm:$0xff]
      %365 = vmatpush.msra.mxu0 %v364
      %366 = vmatpush.msra.mxu0 %v363
      %367 = vmatpush.msra.mxu0 %v362
      %368 = vmatpush.msra.mxu0 %v361
      %369 = vmatpush.msra.mxu0 %v360
      %370 = vmatpush.msra.mxu0 %v359
      %371 = vmatpush.msra.mxu0 %v358
      %372 = vmatpush.msra.mxu0 %v357
      %373 = vmatpush.msra.mxu0 %v356
      %374 = vmatpush.msra.mxu0 %v355
      %375 = vmatpush.msra.mxu0 %v354
      %376 = vmatpush.msra.mxu0 %v353
      %377 = vmatpush.msra.mxu0 %v352
      %378 = vmatpush.msra.mxu0 %v351
      %379 = vmatpush.msra.mxu0 %v350
      %380 = vmatpush.msra.mxu0 %v349
      %381 = vmatmul.f32.gmra.mxu0 %v336
      %v382 = vpop.f32.mrf.mxu0
      %v383 = vadd.f32 0.0, %v382
      %384 = vmatmul.f32.gmra.mxu0 %v337
      %v385 = vpop.f32.mrf.mxu0
      %v386 = vadd.f32 0.0, %v385
      %387 = vmatmul.f32.gmra.mxu0 %v338
      %v388 = vpop.f32.mrf.mxu0
      %v389 = vadd.f32 0.0, %v388
      %390 = vmatmul.f32.gmra.mxu0 %v339
      %v391 = vpop.f32.mrf.mxu0
      %v392 = vadd.f32 0.0, %v391
      %393 = vmatmul.f32.gmra.mxu0 %v340
      %v394 = vpop.f32.mrf.mxu0
      %v395 = vadd.f32 0.0, %v394
      %396 = vmatmul.f32.gmra.mxu0 %v341
      %v397 = vpop.f32.mrf.mxu0
      %v398 = vadd.f32 0.0, %v397
      %399 = vmatmul.f32.gmra.mxu0 %v342
      %v400 = vpop.f32.mrf.mxu0
      %v401 = vadd.f32 0.0, %v400
      %402 = vmatmul.f32.gmra.mxu0 %v343
      %v403 = vpop.f32.mrf.mxu0
      %v404 = vadd.f32 0.0, %v403
      %405 = vmatmul.f32.gmra.mxu0 %v344
      %v406 = vpop.f32.mrf.mxu0
      %v407 = vadd.f32 0.0, %v406
      %408 = vmatmul.f32.gmra.mxu0 %v345
      %v409 = vpop.f32.mrf.mxu0
      %v410 = vadd.f32 0.0, %v409
      %411 = vmatmul.f32.gmra.mxu0 %v346
      %v412 = vpop.f32.mrf.mxu0
      %v413 = vadd.f32 0.0, %v412
      %414 = vmatmul.f32.gmra.mxu0 %v347
      %v415 = vpop.f32.mrf.mxu0
      %v416 = vadd.f32 0.0, %v415
      %417 = vdwg.mxu0
      %v418 = vadd.f32 %v301, %v383
      %v419 = vadd.f32 %v304, %v386
      %v420 = vadd.f32 %v307, %v389
      %v421 = vadd.f32 %v310, %v392
      %v422 = vadd.f32 %v313, %v395
      %v423 = vadd.f32 %v316, %v398
      %v424 = vadd.f32 %v319, %v401
      %v425 = vadd.f32 %v322, %v404
      %v426 = vadd.f32 %v325, %v407
      %v427 = vadd.f32 %v328, %v410
      %v428 = vadd.f32 %v331, %v413
      %v429 = vadd.f32 %v334, %v416
      %s430 = scalar_lea.vmem %s161, 24
      %v431 = vld [vmem:[%s430] sm:$0xff]
      %v432 = vld [vmem:[%s430 + $0x8] sm:$0xff]
      %v433 = vld [vmem:[%s430 + $0x18] sm:$0xff]
      %v434 = vld [vmem:[%s430 + $0x20] sm:$0xff]
      %v435 = vld [vmem:[%s430 + $0x30] sm:$0xff]
      %v436 = vld [vmem:[%s430 + $0x38] sm:$0xff]
      %v437 = vld [vmem:[%s430 + $0x48] sm:$0xff]
      %v438 = vld [vmem:[%s430 + $0x50] sm:$0xff]
      %v439 = vld [vmem:[%s430 + $0x60] sm:$0xff]
      %v440 = vld [vmem:[%s430 + $0x68] sm:$0xff]
      %v441 = vld [vmem:[%s430 + $0x78] sm:$0xff]
      %v442 = vld [vmem:[%s430 + $0x80] sm:$0xff]
      %s443 = scalar_lea.vmem %s1, 384
      %v444 = vld [vmem:[%s443] sm:$0xff]
      %v445 = vld [vmem:[%s443 + $0x8] sm:$0xff]
      %v446 = vld [vmem:[%s443 + $0x10] sm:$0xff]
      %v447 = vld [vmem:[%s443 + $0x18] sm:$0xff]
      %v448 = vld [vmem:[%s443 + $0x20] sm:$0xff]
      %v449 = vld [vmem:[%s443 + $0x28] sm:$0xff]
      %v450 = vld [vmem:[%s443 + $0x30] sm:$0xff]
      %v451 = vld [vmem:[%s443 + $0x38] sm:$0xff]
      %v452 = vld [vmem:[%s443 + $0x40] sm:$0xff]
      %v453 = vld [vmem:[%s443 + $0x48] sm:$0xff]
      %v454 = vld [vmem:[%s443 + $0x50] sm:$0xff]
      %v455 = vld [vmem:[%s443 + $0x58] sm:$0xff]
      %v456 = vld [vmem:[%s443 + $0x60] sm:$0xff]
      %v457 = vld [vmem:[%s443 + $0x68] sm:$0xff]
      %v458 = vld [vmem:[%s443 + $0x70] sm:$0xff]
      %v459 = vld [vmem:[%s443 + $0x78] sm:$0xff]
      %460 = vmatpush.msra.mxu0 %v459
      %461 = vmatpush.msra.mxu0 %v458
      %462 = vmatpush.msra.mxu0 %v457
      %463 = vmatpush.msra.mxu0 %v456
      %464 = vmatpush.msra.mxu0 %v455
      %465 = vmatpush.msra.mxu0 %v454
      %466 = vmatpush.msra.mxu0 %v453
      %467 = vmatpush.msra.mxu0 %v452
      %468 = vmatpush.msra.mxu0 %v451
      %469 = vmatpush.msra.mxu0 %v450
      %470 = vmatpush.msra.mxu0 %v449
      %471 = vmatpush.msra.mxu0 %v448
      %472 = vmatpush.msra.mxu0 %v447
      %473 = vmatpush.msra.mxu0 %v446
      %474 = vmatpush.msra.mxu0 %v445
      %475 = vmatpush.msra.mxu0 %v444
      %476 = vmatmul.f32.gmra.mxu0 %v431
      %v477 = vpop.f32.mrf.mxu0
      %v478 = vadd.f32 0.0, %v477
      %479 = vmatmul.f32.gmra.mxu0 %v432
      %v480 = vpop.f32.mrf.mxu0
      %v481 = vadd.f32 0.0, %v480
      %482 = vmatmul.f32.gmra.mxu0 %v433
      %v483 = vpop.f32.mrf.mxu0
      %v484 = vadd.f32 0.0, %v483
      %485 = vmatmul.f32.gmra.mxu0 %v434
      %v486 = vpop.f32.mrf.mxu0
      %v487 = vadd.f32 0.0, %v486
      %488 = vmatmul.f32.gmra.mxu0 %v435
      %v489 = vpop.f32.mrf.mxu0
      %v490 = vadd.f32 0.0, %v489
      %491 = vmatmul.f32.gmra.mxu0 %v436
      %v492 = vpop.f32.mrf.mxu0
      %v493 = vadd.f32 0.0, %v492
      %494 = vmatmul.f32.gmra.mxu0 %v437
      %v495 = vpop.f32.mrf.mxu0
      %v496 = vadd.f32 0.0, %v495
      %497 = vmatmul.f32.gmra.mxu0 %v438
      %v498 = vpop.f32.mrf.mxu0
      %v499 = vadd.f32 0.0, %v498
      %500 = vmatmul.f32.gmra.mxu0 %v439
      %v501 = vpop.f32.mrf.mxu0
      %v502 = vadd.f32 0.0, %v501
      %503 = vmatmul.f32.gmra.mxu0 %v440
      %v504 = vpop.f32.mrf.mxu0
      %v505 = vadd.f32 0.0, %v504
      %506 = vmatmul.f32.gmra.mxu0 %v441
      %v507 = vpop.f32.mrf.mxu0
      %v508 = vadd.f32 0.0, %v507
      %509 = vmatmul.f32.gmra.mxu0 %v442
      %v510 = vpop.f32.mrf.mxu0
      %v511 = vadd.f32 0.0, %v510
      %512 = vdwg.mxu0
      %v513 = vadd.f32 %v418, %v478
      %v514 = vadd.f32 %v419, %v481
      %v515 = vadd.f32 %v420, %v484
      %v516 = vadd.f32 %v421, %v487
      %v517 = vadd.f32 %v422, %v490
      %v518 = vadd.f32 %v423, %v493
      %v519 = vadd.f32 %v424, %v496
      %v520 = vadd.f32 %v425, %v499
      %v521 = vadd.f32 %v426, %v502
      %v522 = vadd.f32 %v427, %v505
      %v523 = vadd.f32 %v428, %v508
      %v524 = vadd.f32 %v429, %v511
      %v525 = vld [vmem:[%s430 + $0x1] sm:$0xff]
      %v526 = vld [vmem:[%s430 + $0x9] sm:$0xff]
      %v527 = vld [vmem:[%s430 + $0x19] sm:$0xff]
      %v528 = vld [vmem:[%s430 + $0x21] sm:$0xff]
      %v529 = vld [vmem:[%s430 + $0x31] sm:$0xff]
      %v530 = vld [vmem:[%s430 + $0x39] sm:$0xff]
      %v531 = vld [vmem:[%s430 + $0x49] sm:$0xff]
      %v532 = vld [vmem:[%s430 + $0x51] sm:$0xff]
      %v533 = vld [vmem:[%s430 + $0x61] sm:$0xff]
      %v534 = vld [vmem:[%s430 + $0x69] sm:$0xff]
      %v535 = vld [vmem:[%s430 + $0x79] sm:$0xff]
      %v536 = vld [vmem:[%s430 + $0x81] sm:$0xff]
      %s537 = scalar_lea.vmem %s1, 512
      %v538 = vld [vmem:[%s537] sm:$0xff]
      %v539 = vld [vmem:[%s537 + $0x8] sm:$0xff]
      %v540 = vld [vmem:[%s537 + $0x10] sm:$0xff]
      %v541 = vld [vmem:[%s537 + $0x18] sm:$0xff]
      %v542 = vld [vmem:[%s537 + $0x20] sm:$0xff]
      %v543 = vld [vmem:[%s537 + $0x28] sm:$0xff]
      %v544 = vld [vmem:[%s537 + $0x30] sm:$0xff]
      %v545 = vld [vmem:[%s537 + $0x38] sm:$0xff]
      %v546 = vld [vmem:[%s537 + $0x40] sm:$0xff]
      %v547 = vld [vmem:[%s537 + $0x48] sm:$0xff]
      %v548 = vld [vmem:[%s537 + $0x50] sm:$0xff]
      %v549 = vld [vmem:[%s537 + $0x58] sm:$0xff]
      %v550 = vld [vmem:[%s537 + $0x60] sm:$0xff]
      %v551 = vld [vmem:[%s537 + $0x68] sm:$0xff]
      %v552 = vld [vmem:[%s537 + $0x70] sm:$0xff]
      %v553 = vld [vmem:[%s537 + $0x78] sm:$0xff]
      %554 = vmatpush.msra.mxu0 %v553
      %555 = vmatpush.msra.mxu0 %v552
      %556 = vmatpush.msra.mxu0 %v551
      %557 = vmatpush.msra.mxu0 %v550
      %558 = vmatpush.msra.mxu0 %v549
      %559 = vmatpush.msra.mxu0 %v548
      %560 = vmatpush.msra.mxu0 %v547
      %561 = vmatpush.msra.mxu0 %v546
      %562 = vmatpush.msra.mxu0 %v545
      %563 = vmatpush.msra.mxu0 %v544
      %564 = vmatpush.msra.mxu0 %v543
      %565 = vmatpush.msra.mxu0 %v542
      %566 = vmatpush.msra.mxu0 %v541
      %567 = vmatpush.msra.mxu0 %v540
      %568 = vmatpush.msra.mxu0 %v539
      %569 = vmatpush.msra.mxu0 %v538
      %570 = vmatmul.f32.gmra.mxu0 %v525
      %v571 = vpop.f32.mrf.mxu0
      %v572 = vadd.f32 0.0, %v571
      %573 = vmatmul.f32.gmra.mxu0 %v526
      %v574 = vpop.f32.mrf.mxu0
      %v575 = vadd.f32 0.0, %v574
      %576 = vmatmul.f32.gmra.mxu0 %v527
      %v577 = vpop.f32.mrf.mxu0
      %v578 = vadd.f32 0.0, %v577
      %579 = vmatmul.f32.gmra.mxu0 %v528
      %v580 = vpop.f32.mrf.mxu0
      %v581 = vadd.f32 0.0, %v580
      %582 = vmatmul.f32.gmra.mxu0 %v529
      %v583 = vpop.f32.mrf.mxu0
      %v584 = vadd.f32 0.0, %v583
      %585 = vmatmul.f32.gmra.mxu0 %v530
      %v586 = vpop.f32.mrf.mxu0
      %v587 = vadd.f32 0.0, %v586
      %588 = vmatmul.f32.gmra.mxu0 %v531
      %v589 = vpop.f32.mrf.mxu0
      %v590 = vadd.f32 0.0, %v589
      %591 = vmatmul.f32.gmra.mxu0 %v532
      %v592 = vpop.f32.mrf.mxu0
      %v593 = vadd.f32 0.0, %v592
      %594 = vmatmul.f32.gmra.mxu0 %v533
      %v595 = vpop.f32.mrf.mxu0
      %v596 = vadd.f32 0.0, %v595
      %597 = vmatmul.f32.gmra.mxu0 %v534
      %v598 = vpop.f32.mrf.mxu0
      %v599 = vadd.f32 0.0, %v598
      %600 = vmatmul.f32.gmra.mxu0 %v535
      %v601 = vpop.f32.mrf.mxu0
      %v602 = vadd.f32 0.0, %v601
      %603 = vmatmul.f32.gmra.mxu0 %v536
      %v604 = vpop.f32.mrf.mxu0
      %v605 = vadd.f32 0.0, %v604
      %606 = vdwg.mxu0
      %v607 = vadd.f32 %v513, %v572
      %v608 = vadd.f32 %v514, %v575
      %v609 = vadd.f32 %v515, %v578
      %v610 = vadd.f32 %v516, %v581
      %v611 = vadd.f32 %v517, %v584
      %v612 = vadd.f32 %v518, %v587
      %v613 = vadd.f32 %v519, %v590
      %v614 = vadd.f32 %v520, %v593
      %v615 = vadd.f32 %v521, %v596
      %v616 = vadd.f32 %v522, %v599
      %v617 = vadd.f32 %v523, %v602
      %v618 = vadd.f32 %v524, %v605
      %v619 = vld [vmem:[%s430 + $0x2] sm:$0xff]
      %v620 = vld [vmem:[%s430 + $0xa] sm:$0xff]
      %v621 = vld [vmem:[%s430 + $0x1a] sm:$0xff]
      %v622 = vld [vmem:[%s430 + $0x22] sm:$0xff]
      %v623 = vld [vmem:[%s430 + $0x32] sm:$0xff]
      %v624 = vld [vmem:[%s430 + $0x3a] sm:$0xff]
      %v625 = vld [vmem:[%s430 + $0x4a] sm:$0xff]
      %v626 = vld [vmem:[%s430 + $0x52] sm:$0xff]
      %v627 = vld [vmem:[%s430 + $0x62] sm:$0xff]
      %v628 = vld [vmem:[%s430 + $0x6a] sm:$0xff]
      %v629 = vld [vmem:[%s430 + $0x7a] sm:$0xff]
      %v630 = vld [vmem:[%s430 + $0x82] sm:$0xff]
      %s631 = scalar_lea.vmem %s1, 640
      %v632 = vld [vmem:[%s631] sm:$0xff]
      %v633 = vld [vmem:[%s631 + $0x8] sm:$0xff]
      %v634 = vld [vmem:[%s631 + $0x10] sm:$0xff]
      %v635 = vld [vmem:[%s631 + $0x18] sm:$0xff]
      %v636 = vld [vmem:[%s631 + $0x20] sm:$0xff]
      %v637 = vld [vmem:[%s631 + $0x28] sm:$0xff]
      %v638 = vld [vmem:[%s631 + $0x30] sm:$0xff]
      %v639 = vld [vmem:[%s631 + $0x38] sm:$0xff]
      %v640 = vld [vmem:[%s631 + $0x40] sm:$0xff]
      %v641 = vld [vmem:[%s631 + $0x48] sm:$0xff]
      %v642 = vld [vmem:[%s631 + $0x50] sm:$0xff]
      %v643 = vld [vmem:[%s631 + $0x58] sm:$0xff]
      %v644 = vld [vmem:[%s631 + $0x60] sm:$0xff]
      %v645 = vld [vmem:[%s631 + $0x68] sm:$0xff]
      %v646 = vld [vmem:[%s631 + $0x70] sm:$0xff]
      %v647 = vld [vmem:[%s631 + $0x78] sm:$0xff]
      %648 = vmatpush.msra.mxu0 %v647
      %649 = vmatpush.msra.mxu0 %v646
      %650 = vmatpush.msra.mxu0 %v645
      %651 = vmatpush.msra.mxu0 %v644
      %652 = vmatpush.msra.mxu0 %v643
      %653 = vmatpush.msra.mxu0 %v642
      %654 = vmatpush.msra.mxu0 %v641
      %655 = vmatpush.msra.mxu0 %v640
      %656 = vmatpush.msra.mxu0 %v639
      %657 = vmatpush.msra.mxu0 %v638
      %658 = vmatpush.msra.mxu0 %v637
      %659 = vmatpush.msra.mxu0 %v636
      %660 = vmatpush.msra.mxu0 %v635
      %661 = vmatpush.msra.mxu0 %v634
      %662 = vmatpush.msra.mxu0 %v633
      %663 = vmatpush.msra.mxu0 %v632
      %664 = vmatmul.f32.gmra.mxu0 %v619
      %v665 = vpop.f32.mrf.mxu0
      %v666 = vadd.f32 0.0, %v665
      %667 = vmatmul.f32.gmra.mxu0 %v620
      %v668 = vpop.f32.mrf.mxu0
      %v669 = vadd.f32 0.0, %v668
      %670 = vmatmul.f32.gmra.mxu0 %v621
      %v671 = vpop.f32.mrf.mxu0
      %v672 = vadd.f32 0.0, %v671
      %673 = vmatmul.f32.gmra.mxu0 %v622
      %v674 = vpop.f32.mrf.mxu0
      %v675 = vadd.f32 0.0, %v674
      %676 = vmatmul.f32.gmra.mxu0 %v623
      %v677 = vpop.f32.mrf.mxu0
      %v678 = vadd.f32 0.0, %v677
      %679 = vmatmul.f32.gmra.mxu0 %v624
      %v680 = vpop.f32.mrf.mxu0
      %v681 = vadd.f32 0.0, %v680
      %682 = vmatmul.f32.gmra.mxu0 %v625
      %v683 = vpop.f32.mrf.mxu0
      %v684 = vadd.f32 0.0, %v683
      %685 = vmatmul.f32.gmra.mxu0 %v626
      %v686 = vpop.f32.mrf.mxu0
      %v687 = vadd.f32 0.0, %v686
      %688 = vmatmul.f32.gmra.mxu0 %v627
      %v689 = vpop.f32.mrf.mxu0
      %v690 = vadd.f32 0.0, %v689
      %691 = vmatmul.f32.gmra.mxu0 %v628
      %v692 = vpop.f32.mrf.mxu0
      %v693 = vadd.f32 0.0, %v692
      %694 = vmatmul.f32.gmra.mxu0 %v629
      %v695 = vpop.f32.mrf.mxu0
      %v696 = vadd.f32 0.0, %v695
      %697 = vmatmul.f32.gmra.mxu0 %v630
      %v698 = vpop.f32.mrf.mxu0
      %v699 = vadd.f32 0.0, %v698
      %700 = vdwg.mxu0
      %v701 = vadd.f32 %v607, %v666
      %v702 = vadd.f32 %v608, %v669
      %v703 = vadd.f32 %v609, %v672
      %v704 = vadd.f32 %v610, %v675
      %v705 = vadd.f32 %v611, %v678
      %v706 = vadd.f32 %v612, %v681
      %v707 = vadd.f32 %v613, %v684
      %v708 = vadd.f32 %v614, %v687
      %v709 = vadd.f32 %v615, %v690
      %v710 = vadd.f32 %v616, %v693
      %v711 = vadd.f32 %v617, %v696
      %v712 = vadd.f32 %v618, %v699
      %s713 = scalar_lea.vmem %s161, 48
      %v714 = vld [vmem:[%s713] sm:$0xff]
      %v715 = vld [vmem:[%s713 + $0x8] sm:$0xff]
      %v716 = vld [vmem:[%s713 + $0x18] sm:$0xff]
      %v717 = vld [vmem:[%s713 + $0x20] sm:$0xff]
      %v718 = vld [vmem:[%s713 + $0x30] sm:$0xff]
      %v719 = vld [vmem:[%s713 + $0x38] sm:$0xff]
      %v720 = vld [vmem:[%s713 + $0x48] sm:$0xff]
      %v721 = vld [vmem:[%s713 + $0x50] sm:$0xff]
      %v722 = vld [vmem:[%s713 + $0x60] sm:$0xff]
      %v723 = vld [vmem:[%s713 + $0x68] sm:$0xff]
      %v724 = vld [vmem:[%s713 + $0x78] sm:$0xff]
      %v725 = vld [vmem:[%s713 + $0x80] sm:$0xff]
      %s726 = scalar_lea.vmem %s1, 768
      %v727 = vld [vmem:[%s726] sm:$0xff]
      %v728 = vld [vmem:[%s726 + $0x8] sm:$0xff]
      %v729 = vld [vmem:[%s726 + $0x10] sm:$0xff]
      %v730 = vld [vmem:[%s726 + $0x18] sm:$0xff]
      %v731 = vld [vmem:[%s726 + $0x20] sm:$0xff]
      %v732 = vld [vmem:[%s726 + $0x28] sm:$0xff]
      %v733 = vld [vmem:[%s726 + $0x30] sm:$0xff]
      %v734 = vld [vmem:[%s726 + $0x38] sm:$0xff]
      %v735 = vld [vmem:[%s726 + $0x40] sm:$0xff]
      %v736 = vld [vmem:[%s726 + $0x48] sm:$0xff]
      %v737 = vld [vmem:[%s726 + $0x50] sm:$0xff]
      %v738 = vld [vmem:[%s726 + $0x58] sm:$0xff]
      %v739 = vld [vmem:[%s726 + $0x60] sm:$0xff]
      %v740 = vld [vmem:[%s726 + $0x68] sm:$0xff]
      %v741 = vld [vmem:[%s726 + $0x70] sm:$0xff]
      %v742 = vld [vmem:[%s726 + $0x78] sm:$0xff]
      %743 = vmatpush.msra.mxu0 %v742
      %744 = vmatpush.msra.mxu0 %v741
      %745 = vmatpush.msra.mxu0 %v740
      %746 = vmatpush.msra.mxu0 %v739
      %747 = vmatpush.msra.mxu0 %v738
      %748 = vmatpush.msra.mxu0 %v737
      %749 = vmatpush.msra.mxu0 %v736
      %750 = vmatpush.msra.mxu0 %v735
      %751 = vmatpush.msra.mxu0 %v734
      %752 = vmatpush.msra.mxu0 %v733
      %753 = vmatpush.msra.mxu0 %v732
      %754 = vmatpush.msra.mxu0 %v731
      %755 = vmatpush.msra.mxu0 %v730
      %756 = vmatpush.msra.mxu0 %v729
      %757 = vmatpush.msra.mxu0 %v728
      %758 = vmatpush.msra.mxu0 %v727
      %759 = vmatmul.f32.gmra.mxu0 %v714
      %v760 = vpop.f32.mrf.mxu0
      %v761 = vadd.f32 0.0, %v760
      %762 = vmatmul.f32.gmra.mxu0 %v715
      %v763 = vpop.f32.mrf.mxu0
      %v764 = vadd.f32 0.0, %v763
      %765 = vmatmul.f32.gmra.mxu0 %v716
      %v766 = vpop.f32.mrf.mxu0
      %v767 = vadd.f32 0.0, %v766
      %768 = vmatmul.f32.gmra.mxu0 %v717
      %v769 = vpop.f32.mrf.mxu0
      %v770 = vadd.f32 0.0, %v769
      %771 = vmatmul.f32.gmra.mxu0 %v718
      %v772 = vpop.f32.mrf.mxu0
      %v773 = vadd.f32 0.0, %v772
      %774 = vmatmul.f32.gmra.mxu0 %v719
      %v775 = vpop.f32.mrf.mxu0
      %v776 = vadd.f32 0.0, %v775
      %777 = vmatmul.f32.gmra.mxu0 %v720
      %v778 = vpop.f32.mrf.mxu0
      %v779 = vadd.f32 0.0, %v778
      %780 = vmatmul.f32.gmra.mxu0 %v721
      %v781 = vpop.f32.mrf.mxu0
      %v782 = vadd.f32 0.0, %v781
      %783 = vmatmul.f32.gmra.mxu0 %v722
      %v784 = vpop.f32.mrf.mxu0
      %v785 = vadd.f32 0.0, %v784
      %786 = vmatmul.f32.gmra.mxu0 %v723
      %v787 = vpop.f32.mrf.mxu0
      %v788 = vadd.f32 0.0, %v787
      %789 = vmatmul.f32.gmra.mxu0 %v724
      %v790 = vpop.f32.mrf.mxu0
      %v791 = vadd.f32 0.0, %v790
      %792 = vmatmul.f32.gmra.mxu0 %v725
      %v793 = vpop.f32.mrf.mxu0
      %v794 = vadd.f32 0.0, %v793
      %795 = vdwg.mxu0
      %v796 = vadd.f32 %v701, %v761
      %v797 = vadd.f32 %v702, %v764
      %v798 = vadd.f32 %v703, %v767
      %v799 = vadd.f32 %v704, %v770
      %v800 = vadd.f32 %v705, %v773
      %v801 = vadd.f32 %v706, %v776
      %v802 = vadd.f32 %v707, %v779
      %v803 = vadd.f32 %v708, %v782
      %v804 = vadd.f32 %v709, %v785
      %v805 = vadd.f32 %v710, %v788
      %v806 = vadd.f32 %v711, %v791
      %v807 = vadd.f32 %v712, %v794
      %v808 = vld [vmem:[%s713 + $0x1] sm:$0xff]
      %v809 = vld [vmem:[%s713 + $0x9] sm:$0xff]
      %v810 = vld [vmem:[%s713 + $0x19] sm:$0xff]
      %v811 = vld [vmem:[%s713 + $0x21] sm:$0xff]
      %v812 = vld [vmem:[%s713 + $0x31] sm:$0xff]
      %v813 = vld [vmem:[%s713 + $0x39] sm:$0xff]
      %v814 = vld [vmem:[%s713 + $0x49] sm:$0xff]
      %v815 = vld [vmem:[%s713 + $0x51] sm:$0xff]
      %v816 = vld [vmem:[%s713 + $0x61] sm:$0xff]
      %v817 = vld [vmem:[%s713 + $0x69] sm:$0xff]
      %v818 = vld [vmem:[%s713 + $0x79] sm:$0xff]
      %v819 = vld [vmem:[%s713 + $0x81] sm:$0xff]
      %s820 = scalar_lea.vmem %s1, 896
      %v821 = vld [vmem:[%s820] sm:$0xff]
      %v822 = vld [vmem:[%s820 + $0x8] sm:$0xff]
      %v823 = vld [vmem:[%s820 + $0x10] sm:$0xff]
      %v824 = vld [vmem:[%s820 + $0x18] sm:$0xff]
      %v825 = vld [vmem:[%s820 + $0x20] sm:$0xff]
      %v826 = vld [vmem:[%s820 + $0x28] sm:$0xff]
      %v827 = vld [vmem:[%s820 + $0x30] sm:$0xff]
      %v828 = vld [vmem:[%s820 + $0x38] sm:$0xff]
      %v829 = vld [vmem:[%s820 + $0x40] sm:$0xff]
      %v830 = vld [vmem:[%s820 + $0x48] sm:$0xff]
      %v831 = vld [vmem:[%s820 + $0x50] sm:$0xff]
      %v832 = vld [vmem:[%s820 + $0x58] sm:$0xff]
      %v833 = vld [vmem:[%s820 + $0x60] sm:$0xff]
      %v834 = vld [vmem:[%s820 + $0x68] sm:$0xff]
      %v835 = vld [vmem:[%s820 + $0x70] sm:$0xff]
      %v836 = vld [vmem:[%s820 + $0x78] sm:$0xff]
      %837 = vmatpush.msra.mxu0 %v836
      %838 = vmatpush.msra.mxu0 %v835
      %839 = vmatpush.msra.mxu0 %v834
      %840 = vmatpush.msra.mxu0 %v833
      %841 = vmatpush.msra.mxu0 %v832
      %842 = vmatpush.msra.mxu0 %v831
      %843 = vmatpush.msra.mxu0 %v830
      %844 = vmatpush.msra.mxu0 %v829
      %845 = vmatpush.msra.mxu0 %v828
      %846 = vmatpush.msra.mxu0 %v827
      %847 = vmatpush.msra.mxu0 %v826
      %848 = vmatpush.msra.mxu0 %v825
      %849 = vmatpush.msra.mxu0 %v824
      %850 = vmatpush.msra.mxu0 %v823
      %851 = vmatpush.msra.mxu0 %v822
      %852 = vmatpush.msra.mxu0 %v821
      %853 = vmatmul.f32.gmra.mxu0 %v808
      %v854 = vpop.f32.mrf.mxu0
      %v855 = vadd.f32 0.0, %v854
      %856 = vmatmul.f32.gmra.mxu0 %v809
      %v857 = vpop.f32.mrf.mxu0
      %v858 = vadd.f32 0.0, %v857
      %859 = vmatmul.f32.gmra.mxu0 %v810
      %v860 = vpop.f32.mrf.mxu0
      %v861 = vadd.f32 0.0, %v860
      %862 = vmatmul.f32.gmra.mxu0 %v811
      %v863 = vpop.f32.mrf.mxu0
      %v864 = vadd.f32 0.0, %v863
      %865 = vmatmul.f32.gmra.mxu0 %v812
      %v866 = vpop.f32.mrf.mxu0
      %v867 = vadd.f32 0.0, %v866
      %868 = vmatmul.f32.gmra.mxu0 %v813
      %v869 = vpop.f32.mrf.mxu0
      %v870 = vadd.f32 0.0, %v869
      %871 = vmatmul.f32.gmra.mxu0 %v814
      %v872 = vpop.f32.mrf.mxu0
      %v873 = vadd.f32 0.0, %v872
      %874 = vmatmul.f32.gmra.mxu0 %v815
      %v875 = vpop.f32.mrf.mxu0
      %v876 = vadd.f32 0.0, %v875
      %877 = vmatmul.f32.gmra.mxu0 %v816
      %v878 = vpop.f32.mrf.mxu0
      %v879 = vadd.f32 0.0, %v878
      %880 = vmatmul.f32.gmra.mxu0 %v817
      %v881 = vpop.f32.mrf.mxu0
      %v882 = vadd.f32 0.0, %v881
      %883 = vmatmul.f32.gmra.mxu0 %v818
      %v884 = vpop.f32.mrf.mxu0
      %v885 = vadd.f32 0.0, %v884
      %886 = vmatmul.f32.gmra.mxu0 %v819
      %v887 = vpop.f32.mrf.mxu0
      %v888 = vadd.f32 0.0, %v887
      %889 = vdwg.mxu0
      %v890 = vadd.f32 %v796, %v855
      %v891 = vadd.f32 %v797, %v858
      %v892 = vadd.f32 %v798, %v861
      %v893 = vadd.f32 %v799, %v864
      %v894 = vadd.f32 %v800, %v867
      %v895 = vadd.f32 %v801, %v870
      %v896 = vadd.f32 %v802, %v873
      %v897 = vadd.f32 %v803, %v876
      %v898 = vadd.f32 %v804, %v879
      %v899 = vadd.f32 %v805, %v882
      %v900 = vadd.f32 %v806, %v885
      %v901 = vadd.f32 %v807, %v888
      %v902 = vld [vmem:[%s713 + $0x2] sm:$0xff]
      %v903 = vld [vmem:[%s713 + $0xa] sm:$0xff]
      %v904 = vld [vmem:[%s713 + $0x1a] sm:$0xff]
      %v905 = vld [vmem:[%s713 + $0x22] sm:$0xff]
      %v906 = vld [vmem:[%s713 + $0x32] sm:$0xff]
      %v907 = vld [vmem:[%s713 + $0x3a] sm:$0xff]
      %v908 = vld [vmem:[%s713 + $0x4a] sm:$0xff]
      %v909 = vld [vmem:[%s713 + $0x52] sm:$0xff]
      %v910 = vld [vmem:[%s713 + $0x62] sm:$0xff]
      %v911 = vld [vmem:[%s713 + $0x6a] sm:$0xff]
      %v912 = vld [vmem:[%s713 + $0x7a] sm:$0xff]
      %v913 = vld [vmem:[%s713 + $0x82] sm:$0xff]
      %s914 = scalar_lea.vmem %s1, 1024
      %v915 = vld [vmem:[%s914] sm:$0xff]
      %v916 = vld [vmem:[%s914 + $0x8] sm:$0xff]
      %v917 = vld [vmem:[%s914 + $0x10] sm:$0xff]
      %v918 = vld [vmem:[%s914 + $0x18] sm:$0xff]
      %v919 = vld [vmem:[%s914 + $0x20] sm:$0xff]
      %v920 = vld [vmem:[%s914 + $0x28] sm:$0xff]
      %v921 = vld [vmem:[%s914 + $0x30] sm:$0xff]
      %v922 = vld [vmem:[%s914 + $0x38] sm:$0xff]
      %v923 = vld [vmem:[%s914 + $0x40] sm:$0xff]
      %v924 = vld [vmem:[%s914 + $0x48] sm:$0xff]
      %v925 = vld [vmem:[%s914 + $0x50] sm:$0xff]
      %v926 = vld [vmem:[%s914 + $0x58] sm:$0xff]
      %v927 = vld [vmem:[%s914 + $0x60] sm:$0xff]
      %v928 = vld [vmem:[%s914 + $0x68] sm:$0xff]
      %v929 = vld [vmem:[%s914 + $0x70] sm:$0xff]
      %v930 = vld [vmem:[%s914 + $0x78] sm:$0xff]
      %931 = vmatpush.msra.mxu0 %v930
      %932 = vmatpush.msra.mxu0 %v929
      %933 = vmatpush.msra.mxu0 %v928
      %934 = vmatpush.msra.mxu0 %v927
      %935 = vmatpush.msra.mxu0 %v926
      %936 = vmatpush.msra.mxu0 %v925
      %937 = vmatpush.msra.mxu0 %v924
      %938 = vmatpush.msra.mxu0 %v923
      %939 = vmatpush.msra.mxu0 %v922
      %940 = vmatpush.msra.mxu0 %v921
      %941 = vmatpush.msra.mxu0 %v920
      %942 = vmatpush.msra.mxu0 %v919
      %943 = vmatpush.msra.mxu0 %v918
      %944 = vmatpush.msra.mxu0 %v917
      %945 = vmatpush.msra.mxu0 %v916
      %946 = vmatpush.msra.mxu0 %v915
      %947 = vmatmul.f32.gmra.mxu0 %v902
      %v948 = vpop.f32.mrf.mxu0
      %v949 = vadd.f32 0.0, %v948
      %950 = vmatmul.f32.gmra.mxu0 %v903
      %v951 = vpop.f32.mrf.mxu0
      %v952 = vadd.f32 0.0, %v951
      %953 = vmatmul.f32.gmra.mxu0 %v904
      %v954 = vpop.f32.mrf.mxu0
      %v955 = vadd.f32 0.0, %v954
      %956 = vmatmul.f32.gmra.mxu0 %v905
      %v957 = vpop.f32.mrf.mxu0
      %v958 = vadd.f32 0.0, %v957
      %959 = vmatmul.f32.gmra.mxu0 %v906
      %v960 = vpop.f32.mrf.mxu0
      %v961 = vadd.f32 0.0, %v960
      %962 = vmatmul.f32.gmra.mxu0 %v907
      %v963 = vpop.f32.mrf.mxu0
      %v964 = vadd.f32 0.0, %v963
      %965 = vmatmul.f32.gmra.mxu0 %v908
      %v966 = vpop.f32.mrf.mxu0
      %v967 = vadd.f32 0.0, %v966
      %968 = vmatmul.f32.gmra.mxu0 %v909
      %v969 = vpop.f32.mrf.mxu0
      %v970 = vadd.f32 0.0, %v969
      %971 = vmatmul.f32.gmra.mxu0 %v910
      %v972 = vpop.f32.mrf.mxu0
      %v973 = vadd.f32 0.0, %v972
      %974 = vmatmul.f32.gmra.mxu0 %v911
      %v975 = vpop.f32.mrf.mxu0
      %v976 = vadd.f32 0.0, %v975
      %977 = vmatmul.f32.gmra.mxu0 %v912
      %v978 = vpop.f32.mrf.mxu0
      %v979 = vadd.f32 0.0, %v978
      %980 = vmatmul.f32.gmra.mxu0 %v913
      %v981 = vpop.f32.mrf.mxu0
      %v982 = vadd.f32 0.0, %v981
      %983 = vdwg.mxu0
      %v984 = vadd.f32 %v890, %v949
      %v985 = vadd.f32 %v891, %v952
      %v986 = vadd.f32 %v892, %v955
      %v987 = vadd.f32 %v893, %v958
      %v988 = vadd.f32 %v894, %v961
      %v989 = vadd.f32 %v895, %v964
      %v990 = vadd.f32 %v896, %v967
      %v991 = vadd.f32 %v897, %v970
      %v992 = vadd.f32 %v898, %v973
      %v993 = vadd.f32 %v899, %v976
      %v994 = vadd.f32 %v900, %v979
      %v995 = vadd.f32 %v901, %v982
      %s996 = smul.u32 %s17, 3
      %s997 = sadd.s32 %s996, %s18
      %p998 = scmp.lt.s32.totalorder %s997, 0
      %s999 = ssub.s32 0, %s997
      %s1000 = scalar_select %p998, %s999, %s997
      %s1001 = sdiv.u32.pop %s1000, 3
      %s1002 = srem.u32.pop %s1000, 3
      %s1003 = ssub.s32 0, %s1002
      %s1004 = scalar_select %p998, %s1003, %s1002
      %s1005 = smul.u32 %s1004, 6
      %s1006 = ssub.s32 16, %s1005
      %s1007 = smul.u32 %s1006, 16
      %v1008 = vlaneseq
      %v1009 = vshrl.u32 %v1008, 7
      %v1010 = vadd.s32 %v1009, 8
      %v1011 = vadd.s32 %v1009, 16
      %v1012 = vadd.s32 %v1009, 24
      %v1013 = vadd.s32 %v1009, 32
      %v1014 = vadd.s32 %v1009, 40
      %v1015 = vadd.s32 %v1009, 48
      %v1016 = vadd.s32 %v1009, 56
      %v1017 = vadd.s32 %v1009, 64
      %v1018 = vadd.s32 %v1009, 72
      %v1019 = vadd.s32 %v1009, 80
      %v1020 = vadd.s32 %v1009, 88
      %v1021 = vstv %s1007
      %vm1022 = vcmp.lt.s32.totalorder %v1009, %v1021
      %vm1023 = vcmp.lt.s32.totalorder %v1010, %v1021
      %vm1024 = vcmp.lt.s32.totalorder %v1011, %v1021
      %vm1025 = vcmp.lt.s32.totalorder %v1012, %v1021
      %vm1026 = vcmp.lt.s32.totalorder %v1013, %v1021
      %vm1027 = vcmp.lt.s32.totalorder %v1014, %v1021
      %vm1028 = vcmp.lt.s32.totalorder %v1015, %v1021
      %vm1029 = vcmp.lt.s32.totalorder %v1016, %v1021
      %vm1030 = vcmp.lt.s32.totalorder %v1017, %v1021
      %vm1031 = vcmp.lt.s32.totalorder %v1018, %v1021
      %vm1032 = vcmp.lt.s32.totalorder %v1019, %v1021
      %vm1033 = vcmp.lt.s32.totalorder %v1020, %v1021
      %v1034 = vsel %vm1022, 1, 0
      %v1035 = vsel %vm1023, 1, 0
      %v1036 = vsel %vm1024, 1, 0
      %v1037 = vsel %vm1025, 1, 0
      %v1038 = vsel %vm1026, 1, 0
      %v1039 = vsel %vm1027, 1, 0
      %v1040 = vsel %vm1028, 1, 0
      %v1041 = vsel %vm1029, 1, 0
      %v1042 = vsel %vm1030, 1, 0
      %v1043 = vsel %vm1031, 1, 0
      %v1044 = vsel %vm1032, 1, 0
      %v1045 = vsel %vm1033, 1, 0
      %vm1046 = vcmp.eq.s32.totalorder %v1034, 1
      %vm1047 = vcmp.eq.s32.totalorder %v1035, 1
      %vm1048 = vcmp.eq.s32.totalorder %v1036, 1
      %vm1049 = vcmp.eq.s32.totalorder %v1037, 1
      %vm1050 = vcmp.eq.s32.totalorder %v1038, 1
      %vm1051 = vcmp.eq.s32.totalorder %v1039, 1
      %vm1052 = vcmp.eq.s32.totalorder %v1040, 1
      %vm1053 = vcmp.eq.s32.totalorder %v1041, 1
      %vm1054 = vcmp.eq.s32.totalorder %v1042, 1
      %vm1055 = vcmp.eq.s32.totalorder %v1043, 1
      %vm1056 = vcmp.eq.s32.totalorder %v1044, 1
      %vm1057 = vcmp.eq.s32.totalorder %v1045, 1
      %v1058 = vsel %vm1046, %v984, 0.0
      %v1059 = vsel %vm1047, %v985, 0.0
      %v1060 = vsel %vm1048, %v986, 0.0
      %v1061 = vsel %vm1049, %v987, 0.0
      %v1062 = vsel %vm1050, %v988, 0.0
      %v1063 = vsel %vm1051, %v989, 0.0
      %v1064 = vsel %vm1052, %v990, 0.0
      %v1065 = vsel %vm1053, %v991, 0.0
      %v1066 = vsel %vm1054, %v992, 0.0
      %v1067 = vsel %vm1055, %v993, 0.0
      %v1068 = vsel %vm1056, %v994, 0.0
      %v1069 = vsel %vm1057, %v995, 0.0
      %v1070 = vld [vmem:[%s167] sm:$0x1]
      %v1071 = vadd.f32 %v1058, %v1059
      %v1072 = vadd.f32 %v1071, %v1060
      %v1073 = vadd.f32 %v1072, %v1061
      %v1074 = vadd.f32 %v1073, %v1062
      %v1075 = vadd.f32 %v1074, %v1063
      %v1076 = vadd.f32 %v1075, %v1064
      %v1077 = vadd.f32 %v1076, %v1065
      %v1078 = vadd.f32 %v1077, %v1066
      %v1079 = vadd.f32 %v1078, %v1067
      %v1080 = vadd.f32 %v1079, %v1068
      %v1081 = vadd.f32 %v1080, %v1069
      %v1082 = vrot.slane %v1081, 4
      %v1083 = vadd.f32 %v1081, %v1082
      %v1084 = vrot.slane %v1083, 2
      %v1085 = vadd.f32 %v1083, %v1084
      %v1086 = vrot.slane %v1085, 1
      %v1087 = vadd.f32 %v1085, %v1086
      %v1088 = vadd.f32 %v1070, %v1087
      %1089 = vst [vmem:[%s167] sm:$0x1] %v1088
      %v1090 = vld [vmem:[%s167 + $0x1] sm:$0x1]
      %v1091 = vmul.f32 %v1058, %v1058
      %v1092 = vmul.f32 %v1059, %v1059
      %v1093 = vmul.f32 %v1060, %v1060
      %v1094 = vmul.f32 %v1061, %v1061
      %v1095 = vmul.f32 %v1062, %v1062
      %v1096 = vmul.f32 %v1063, %v1063
      %v1097 = vmul.f32 %v1064, %v1064
      %v1098 = vmul.f32 %v1065, %v1065
      %v1099 = vmul.f32 %v1066, %v1066
      %v1100 = vmul.f32 %v1067, %v1067
      %v1101 = vmul.f32 %v1068, %v1068
      %v1102 = vmul.f32 %v1069, %v1069
      %v1103 = vadd.f32 %v1091, %v1092
      %v1104 = vadd.f32 %v1103, %v1093
      %v1105 = vadd.f32 %v1104, %v1094
      %v1106 = vadd.f32 %v1105, %v1095
      %v1107 = vadd.f32 %v1106, %v1096
      %v1108 = vadd.f32 %v1107, %v1097
      %v1109 = vadd.f32 %v1108, %v1098
      %v1110 = vadd.f32 %v1109, %v1099
      %v1111 = vadd.f32 %v1110, %v1100
      %v1112 = vadd.f32 %v1111, %v1101
      %v1113 = vadd.f32 %v1112, %v1102
      %v1114 = vrot.slane %v1113, 4
      %v1115 = vadd.f32 %v1113, %v1114
      %v1116 = vrot.slane %v1115, 2
      %v1117 = vadd.f32 %v1115, %v1116
      %v1118 = vrot.slane %v1117, 1
      %v1119 = vadd.f32 %v1117, %v1118
      %v1120 = vadd.f32 %v1090, %v1119
      %1121 = vst [vmem:[%s167 + $0x1] sm:$0x1] %v1120
      %p1122 = scmp.lt.s32.totalorder %s17, 1
      %s1123 = scalar_select %p1122, %s17, 1
      %s1124 = smul.addr %s1123, 2
      %s1125 = scalar_lea.vmem %s2, %s1124
      // Predicated region
      $region33: #{conv_module_ex.2} parent=27 // pred_check
        %p1126 = pneg %p94
      $region34: #{conv_module_ex.2} parent=27 // pred_check_branch
        %1128 = sbr.rel (%p1126) target = $region36
      $region35: #{conv_module_ex.2} parent=27 // pred_region
        _
      $region36: #{conv_module_ex.2} parent=27 // pred_fallthru
        _
    $region28: #{conv_module_ex.2} parent=5 // pred_fallthru
      _
    %p1129 = scmp.le.s32.totalorder 2, %s8
    // Predicated region
    $region37: #{conv_module_ex.2} parent=5 // pred_check
      %p1130 = pneg %p1129
    $region38: #{conv_module_ex.2} parent=5 // pred_check_branch
      %1132 = sbr.rel (%p1130) target = $region40
    $region39: #{conv_module_ex.2} parent=5 // pred_region
      %s1133 = ssub.s32 %s8, 2
      // Predicated region
      $region41: #{conv_module_ex.2} parent=39 // pred_check
        %p1134 = pneg %p100
      $region42: #{conv_module_ex.2} parent=39 // pred_check_branch
        %1136 = sbr.rel (%p1134) target = $region44
      $region43: #{conv_module_ex.2} parent=39 // pred_region
        %p1137 = scmp.lt.s32.totalorder %s19, 1
        %s1138 = scalar_select %p1137, %s19, 1
        %s1139 = smul.addr %s1138, 2
        %s1140 = scalar_lea.vmem %s2, %s1139
      $region44: #{conv_module_ex.2} parent=39 // pred_fallthru
        _
    $region40: #{conv_module_ex.2} parent=5 // pred_fallthru
      _
  $region6: #{conv_module_ex.2} parent=0 // loop_footer
    %s12 = sadd.s32 1, %s8
  $region7: #{conv_module_ex.2} parent=0 // loop_footer_branch
    %7 = sbr.rel target = $region3
  $region8: #{conv_module_ex.2} parent=0 // loop_exit
    _

// kernel: conv_module_ex.3
$region0: #{conv_module_ex.3}
  #allocation0 [shape = 'u32[]', space=smem, size = 0x4, offset = 0x4, fixed_abs, tag = 'smem constant byte address 0x4 - core index']
  #allocation1 [shape = 'u32[72,128]{1,0:T(1,128)}', space=vmem, size = 0x9000, scoped, tag = 'internal scratch']
  %s0 = inlined_call_operand.vmem [shape: f32[6,8,18,128], index: 0, kind: input, shape index: {}]
  %s1 = inlined_call_operand.vmem [shape: f32[9,128,128], index: 1, kind: input, shape index: {}]
  %s2 = inlined_call_operand.vmem [shape: f32[2,128], index: 2, kind: input, shape index: {}]
  %s3 = inlined_call_operand.vmem [shape: f32[576,128], index: 3, kind: output, shape index: {}]
  %s4 = sld [smem:[#allocation0]]
  $region45: #{conv_module_ex.3} parent=0
    _
  %s6 = ssub.s32 1, %s4
  %s7 = scalar_select 0, %s6, %s4
  loop: start=0, step=1, limit=8
  $region2: #{conv_module_ex.3} parent=0 // loop_pre_header
    _
  $region3: #{conv_module_ex.3} parent=0 // loop_header
    %s9 = sphi 0, %s13
    %p10 = scmp.ge.s32.totalorder %s9, 8
    %s19 = sphi 0, %s21
    %s22 = sphi 0, %s19
    %s23 = sphi 0, %s22
    %s39 = sphi 0, %s23
    %s43 = sphi 0, %s43
    %s45 = sphi 0, %s43
    %s46 = sphi 0, %s45
    %s60 = sphi 0, %s46
    %s64 = sphi 0, %s64
    %s66 = sphi 0, %s64
    %s67 = sphi 0, %s66
    %s81 = sphi 0, %s67
    %s87 = sphi 0, %s89
    %s90 = sphi 0, %s87
    %s91 = sphi 0, %s90
    %s107 = sphi 0, %s91
  $region4: #{conv_module_ex.3} parent=0 // loop_header_branch
    %12 = sbr.rel (%p10) target = $region8
  $region5: #{conv_module_ex.3} parent=0 // loop_body
    %s14 = ssub.s32 %s9, 1
    %s15 = ssub.s32 %s9, 2
    %s16 = sadd.s32 %s9, 1
    %s17 = ssub.s32 %s9, %s16
    %p18 = scmp.eq.s32.totalorder %s17, 0
    %s20 = sadd.s32 %s19, 1
    %s21 = scalar_select %p18, %s19, %s20
    %p24 = pneg %p18
    %p25 = scmp.eq.s32.totalorder %s9, 5
    %p26 = por %p24, %p25
    %p27 = scmp.ne.s32.totalorder %s19, %s22
    %p28 = scmp.eq.s32.totalorder %s9, 0
    %p29 = por %p27, %p28
    %p30 = scmp.ne.s32.totalorder %s19, %s22
    %p31 = scmp.eq.s32.totalorder %s14, 5
    %p32 = por %p30, %p31
    %p33 = scmp.ne.s32.totalorder %s22, %s23
    %p34 = scmp.eq.s32.totalorder %s14, 0
    %p35 = por %p33, %p34
    %p36 = scmp.ne.s32.totalorder %s22, %s23
    %p37 = scmp.eq.s32.totalorder %s15, 5
    %p38 = por %p36, %p37
    %p40 = scmp.ne.s32.totalorder %s23, %s39
    %p41 = scmp.eq.s32.totalorder %s15, 0
    %p42 = por %p40, %p41
    %s44 = sadd.s32 %s43, 1
    %p47 = scmp.eq.s32.totalorder %s9, 5
    %p48 = scmp.ne.s32.totalorder %s43, %s45
    %p49 = scmp.eq.s32.totalorder %s9, 0
    %p50 = por %p48, %p49
    %p51 = scmp.ne.s32.totalorder %s43, %s45
    %p52 = scmp.eq.s32.totalorder %s14, 5
    %p53 = por %p51, %p52
    %p54 = scmp.ne.s32.totalorder %s45, %s46
    %p55 = scmp.eq.s32.totalorder %s14, 0
    %p56 = por %p54, %p55
    %p57 = scmp.ne.s32.totalorder %s45, %s46
    %p58 = scmp.eq.s32.totalorder %s15, 5
    %p59 = por %p57, %p58
    %p61 = scmp.ne.s32.totalorder %s46, %s60
    %p62 = scmp.eq.s32.totalorder %s15, 0
    %p63 = por %p61, %p62
    %s65 = sadd.s32 %s64, 1
    %p68 = scmp.eq.s32.totalorder %s9, 5
    %p69 = scmp.ne.s32.totalorder %s64, %s66
    %p70 = scmp.eq.s32.totalorder %s9, 0
    %p71 = por %p69, %p70
    %p72 = scmp.ne.s32.totalorder %s64, %s66
    %p73 = scmp.eq.s32.totalorder %s14, 5
    %p74 = por %p72, %p73
    %p75 = scmp.ne.s32.totalorder %s66, %s67
    %p76 = scmp.eq.s32.totalorder %s14, 0
    %p77 = por %p75, %p76
    %p78 = scmp.ne.s32.totalorder %s66, %s67
    %p79 = scmp.eq.s32.totalorder %s15, 5
    %p80 = por %p78, %p79
    %p82 = scmp.ne.s32.totalorder %s67, %s81
    %p83 = scmp.eq.s32.totalorder %s15, 0
    %p84 = por %p82, %p83
    %s85 = ssub.s32 %s9, %s16
    %p86 = scmp.eq.s32.totalorder %s85, 0
    %s88 = sadd.s32 %s87, 1
    %s89 = scalar_select %p86, %s87, %s88
    %p92 = pneg %p86
    %p93 = scmp.eq.s32.totalorder %s9, 5
    %p94 = por %p92, %p93
    %p95 = scmp.ne.s32.totalorder %s87, %s90
    %p96 = scmp.eq.s32.totalorder %s9, 0
    %p97 = por %p95, %p96
    %p98 = scmp.ne.s32.totalorder %s87, %s90
    %p99 = scmp.eq.s32.totalorder %s14, 5
    %p100 = por %p98, %p99
    %p101 = scmp.ne.s32.totalorder %s90, %s91
    %p102 = scmp.eq.s32.totalorder %s14, 0
    %p103 = por %p101, %p102
    %p104 = scmp.ne.s32.totalorder %s90, %s91
    %p105 = scmp.eq.s32.totalorder %s15, 5
    %p106 = por %p104, %p105
    %p108 = scmp.ne.s32.totalorder %s91, %s107
    %p109 = scmp.eq.s32.totalorder %s15, 0
    %p110 = por %p108, %p109
    %p111 = scmp.le.s32.totalorder 1, %s9
    %p112 = scmp.lt.s32.totalorder %s9, 7
    %p113 = pnand %p111, %p112
    %p114 = pneg %p113
    // Predicated region
    $region9: #{conv_module_ex.3} parent=5 // pred_check
      _
    $region10: #{conv_module_ex.3} parent=5 // pred_check_branch
      %116 = sbr.rel (%p113) target = $region12
    $region11: #{conv_module_ex.3} parent=5 // pred_region
      %s117 = ssub.s32 %s9, 1
      // Predicated region
      $region13: #{conv_module_ex.3} parent=11 // pred_check
        %p118 = pneg %p56
      $region14: #{conv_module_ex.3} parent=11 // pred_check_branch
        %120 = sbr.rel (%p118) target = $region16
      $region15: #{conv_module_ex.3} parent=11 // pred_region
        _
      $region16: #{conv_module_ex.3} parent=11 // pred_fallthru
        _
      // Predicated region
      $region17: #{conv_module_ex.3} parent=11 // pred_check
        %p121 = pneg %p77
      $region18: #{conv_module_ex.3} parent=11 // pred_check_branch
        %123 = sbr.rel (%p121) target = $region20
      $region19: #{conv_module_ex.3} parent=11 // pred_region
        _
      $region20: #{conv_module_ex.3} parent=11 // pred_fallthru
        _
    $region12: #{conv_module_ex.3} parent=5 // pred_fallthru
      _
    %p124 = scmp.lt.s32.totalorder %s9, 6
    // Predicated region
    $region21: #{conv_module_ex.3} parent=5 // pred_check
      %p125 = pneg %p124
    $region22: #{conv_module_ex.3} parent=5 // pred_check_branch
      %127 = sbr.rel (%p125) target = $region24
    $region23: #{conv_module_ex.3} parent=5 // pred_region
      // Predicated region
      $region25: #{conv_module_ex.3} parent=23 // pred_check
        %p128 = pneg %p29
      $region26: #{conv_module_ex.3} parent=23 // pred_check_branch
        %130 = sbr.rel (%p128) target = $region28
      $region27: #{conv_module_ex.3} parent=23 // pred_region
        %p131 = scmp.lt.s32.totalorder %s9, 5
        %s132 = scalar_select %p131, %s9, 5
        %s133 = smul.addr %s132, 24
        %s134 = smul.addr %s133, 8
        %s135 = scalar_lea.vmem %s0, %s134
      $region28: #{conv_module_ex.3} parent=23 // pred_fallthru
        _
    $region24: #{conv_module_ex.3} parent=5 // pred_fallthru
      _
    %p136 = scmp.le.s32.totalorder 1, %s9
    %p137 = scmp.lt.s32.totalorder %s9, 7
    %p138 = pnand %p136, %p137
    %p139 = pneg %p138
    // Predicated region
    $region29: #{conv_module_ex.3} parent=5 // pred_check
      _
    $region30: #{conv_module_ex.3} parent=5 // pred_check_branch
      %141 = sbr.rel (%p138) target = $region32
    $region31: #{conv_module_ex.3} parent=5 // pred_region
      %s142 = ssub.s32 %s9, 1
      %p143 = scmp.lt.s32.totalorder %s14, 5
      %s144 = scalar_select %p143, %s14, 5
      %s145 = smul.addr %s144, 24
      %s146 = smul.addr %s145, 8
      %s147 = scalar_lea.vmem %s0, %s146
      %p148 = pneg %p35
      %p149 = pneg %p32
      %p150 = pneg %p56
      %p151 = pneg %p53
      %p152 = pneg %p77
      %p153 = pneg %p74
      %p154 = pneg %p103
      %p155 = pneg %p100
      %s156 = smul.u32 12, %s14
      %p157 = scmp.lt.s32.totalorder %s156, 71
      %s158 = scalar_select %p157, %s156, 71
      %s159 = smul.addr %s158, 8
      %s160 = scalar_lea.vmem %s3, %s159
      %p161 = scmp.lt.s32.totalorder %s14, 5
      %s162 = scalar_select %p161, %s14, 5
      %s163 = smul.addr %s162, 24
      %s164 = smul.addr %s163, 8
      %s165 = scalar_lea.vmem %s0, %s164
      %s166 = smul.u32 12, %s14
      %p167 = scmp.lt.s32.totalorder %s166, 71
      %s168 = scalar_select %p167, %s166, 71
      %s169 = smul.addr %s168, 8
      %s170 = scalar_lea.vmem %s3, %s169
      %s171 = smul.u32 12, %s14
      %v172 = vld [vmem:[%s165] sm:$0xff]
      %v173 = vld [vmem:[%s165 + $0x8] sm:$0xff]
      %v174 = vld [vmem:[%s165 + $0x18] sm:$0xff]
      %v175 = vld [vmem:[%s165 + $0x20] sm:$0xff]
      %v176 = vld [vmem:[%s165 + $0x30] sm:$0xff]
      %v177 = vld [vmem:[%s165 + $0x38] sm:$0xff]
      %v178 = vld [vmem:[%s165 + $0x48] sm:$0xff]
      %v179 = vld [vmem:[%s165 + $0x50] sm:$0xff]
      %v180 = vld [vmem:[%s165 + $0x60] sm:$0xff]
      %v181 = vld [vmem:[%s165 + $0x68] sm:$0xff]
      %v182 = vld [vmem:[%s165 + $0x78] sm:$0xff]
      %v183 = vld [vmem:[%s165 + $0x80] sm:$0xff]
      %v184 = vld [vmem:[%s1] sm:$0xff]
      %v185 = vld [vmem:[%s1 + $0x8] sm:$0xff]
      %v186 = vld [vmem:[%s1 + $0x10] sm:$0xff]
      %v187 = vld [vmem:[%s1 + $0x18] sm:$0xff]
      %v188 = vld [vmem:[%s1 + $0x20] sm:$0xff]
      %v189 = vld [vmem:[%s1 + $0x28] sm:$0xff]
      %v190 = vld [vmem:[%s1 + $0x30] sm:$0xff]
      %v191 = vld [vmem:[%s1 + $0x38] sm:$0xff]
      %v192 = vld [vmem:[%s1 + $0x40] sm:$0xff]
      %v193 = vld [vmem:[%s1 + $0x48] sm:$0xff]
      %v194 = vld [vmem:[%s1 + $0x50] sm:$0xff]
      %v195 = vld [vmem:[%s1 + $0x58] sm:$0xff]
      %v196 = vld [vmem:[%s1 + $0x60] sm:$0xff]
      %v197 = vld [vmem:[%s1 + $0x68] sm:$0xff]
      %v198 = vld [vmem:[%s1 + $0x70] sm:$0xff]
      %v199 = vld [vmem:[%s1 + $0x78] sm:$0xff]
      %v200 = vld [vmem:[%s165 + $0x1] sm:$0xff]
      %v201 = vld [vmem:[%s165 + $0x9] sm:$0xff]
      %v202 = vld [vmem:[%s165 + $0x19] sm:$0xff]
      %v203 = vld [vmem:[%s165 + $0x21] sm:$0xff]
      %v204 = vld [vmem:[%s165 + $0x31] sm:$0xff]
      %v205 = vld [vmem:[%s165 + $0x39] sm:$0xff]
      %v206 = vld [vmem:[%s165 + $0x49] sm:$0xff]
      %v207 = vld [vmem:[%s165 + $0x51] sm:$0xff]
      %v208 = vld [vmem:[%s165 + $0x61] sm:$0xff]
      %v209 = vld [vmem:[%s165 + $0x69] sm:$0xff]
      %v210 = vld [vmem:[%s165 + $0x79] sm:$0xff]
      %v211 = vld [vmem:[%s165 + $0x81] sm:$0xff]
      %s212 = scalar_lea.vmem %s1, 128
      %v213 = vld [vmem:[%s212] sm:$0xff]
      %v214 = vld [vmem:[%s212 + $0x8] sm:$0xff]
      %v215 = vld [vmem:[%s212 + $0x10] sm:$0xff]
      %v216 = vld [vmem:[%s212 + $0x18] sm:$0xff]
      %v217 = vld [vmem:[%s212 + $0x20] sm:$0xff]
      %v218 = vld [vmem:[%s212 + $0x28] sm:$0xff]
      %v219 = vld [vmem:[%s212 + $0x30] sm:$0xff]
      %v220 = vld [vmem:[%s212 + $0x38] sm:$0xff]
      %v221 = vld [vmem:[%s212 + $0x40] sm:$0xff]
      %v222 = vld [vmem:[%s212 + $0x48] sm:$0xff]
      %v223 = vld [vmem:[%s212 + $0x50] sm:$0xff]
      %v224 = vld [vmem:[%s212 + $0x58] sm:$0xff]
      %v225 = vld [vmem:[%s212 + $0x60] sm:$0xff]
      %v226 = vld [vmem:[%s212 + $0x68] sm:$0xff]
      %v227 = vld [vmem:[%s212 + $0x70] sm:$0xff]
      %v228 = vld [vmem:[%s212 + $0x78] sm:$0xff]
      %229 = vmatpush.msra.mxu0 %v228
      %230 = vmatpush.msra.mxu0 %v227
      %231 = vmatpush.msra.mxu0 %v226
      %232 = vmatpush.msra.mxu0 %v225
      %233 = vmatpush.msra.mxu0 %v224
      %234 = vmatpush.msra.mxu0 %v223
      %235 = vmatpush.msra.mxu0 %v222
      %236 = vmatpush.msra.mxu0 %v221
      %237 = vmatpush.msra.mxu0 %v220
      %238 = vmatpush.msra.mxu0 %v219
      %239 = vmatpush.msra.mxu0 %v218
      %240 = vmatpush.msra.mxu0 %v217
      %241 = vmatpush.msra.mxu0 %v216
      %242 = vmatpush.msra.mxu0 %v215
      %243 = vmatpush.msra.mxu0 %v214
      %244 = vmatpush.msra.mxu0 %v213
      %245 = vmatmul.f32.gmra.mxu0 %v200
      %v246 = vpop.f32.mrf.mxu0
      %v247 = vadd.f32 0.0, %v246
      %248 = vmatmul.f32.gmra.mxu0 %v201
      %v249 = vpop.f32.mrf.mxu0
      %v250 = vadd.f32 0.0, %v249
      %251 = vmatmul.f32.gmra.mxu0 %v202
      %v252 = vpop.f32.mrf.mxu0
      %v253 = vadd.f32 0.0, %v252
      %254 = vmatmul.f32.gmra.mxu0 %v203
      %v255 = vpop.f32.mrf.mxu0
      %v256 = vadd.f32 0.0, %v255
      %257 = vmatmul.f32.gmra.mxu0 %v204
      %v258 = vpop.f32.mrf.mxu0
      %v259 = vadd.f32 0.0, %v258
      %260 = vmatmul.f32.gmra.mxu0 %v205
      %v261 = vpop.f32.mrf.mxu0
      %v262 = vadd.f32 0.0, %v261
      %263 = vmatmul.f32.gmra.mxu0 %v206
      %v264 = vpop.f32.mrf.mxu0
      %v265 = vadd.f32 0.0, %v264
      %266 = vmatmul.f32.gmra.mxu0 %v207
      %v267 = vpop.f32.mrf.mxu0
      %v268 = vadd.f32 0.0, %v267
      %269 = vmatmul.f32.gmra.mxu0 %v208
      %v270 = vpop.f32.mrf.mxu0
      %v271 = vadd.f32 0.0, %v270
      %272 = vmatmul.f32.gmra.mxu0 %v209
      %v273 = vpop.f32.mrf.mxu0
      %v274 = vadd.f32 0.0, %v273
      %275 = vmatmul.f32.gmra.mxu0 %v210
      %v276 = vpop.f32.mrf.mxu0
      %v277 = vadd.f32 0.0, %v276
      %278 = vmatmul.f32.gmra.mxu0 %v211
      %v279 = vpop.f32.mrf.mxu0
      %v280 = vadd.f32 0.0, %v279
      %281 = vdwg.mxu0
      %282 = vmatpush.msra.mxu0 %v199
      %283 = vmatpush.msra.mxu0 %v198
      %284 = vmatpush.msra.mxu0 %v197
      %285 = vmatpush.msra.mxu0 %v196
      %286 = vmatpush.msra.mxu0 %v195
      %287 = vmatpush.msra.mxu0 %v194
      %288 = vmatpush.msra.mxu0 %v193
      %289 = vmatpush.msra.mxu0 %v192
      %290 = vmatpush.msra.mxu0 %v191
      %291 = vmatpush.msra.mxu0 %v190
      %292 = vmatpush.msra.mxu0 %v189
      %293 = vmatpush.msra.mxu0 %v188
      %294 = vmatpush.msra.mxu0 %v187
      %295 = vmatpush.msra.mxu0 %v186
      %296 = vmatpush.msra.mxu0 %v185
      %297 = vmatpush.msra.mxu0 %v184
      %298 = vmatmul.f32.gmra.mxu0 %v172
      %v299 = vpop.f32.mrf.mxu0
      %v300 = vadd.f32 %v247, %v299
      %301 = vmatmul.f32.gmra.mxu0 %v173
      %v302 = vpop.f32.mrf.mxu0
      %v303 = vadd.f32 %v250, %v302
      %304 = vmatmul.f32.gmra.mxu0 %v174
      %v305 = vpop.f32.mrf.mxu0
      %v306 = vadd.f32 %v253, %v305
      %307 = vmatmul.f32.gmra.mxu0 %v175
      %v308 = vpop.f32.mrf.mxu0
      %v309 = vadd.f32 %v256, %v308
      %310 = vmatmul.f32.gmra.mxu0 %v176
      %v311 = vpop.f32.mrf.mxu0
      %v312 = vadd.f32 %v259, %v311
      %313 = vmatmul.f32.gmra.mxu0 %v177
      %v314 = vpop.f32.mrf.mxu0
      %v315 = vadd.f32 %v262, %v314
      %316 = vmatmul.f32.gmra.mxu0 %v178
      %v317 = vpop.f32.mrf.mxu0
      %v318 = vadd.f32 %v265, %v317
      %319 = vmatmul.f32.gmra.mxu0 %v179
      %v320 = vpop.f32.mrf.mxu0
      %v321 = vadd.f32 %v268, %v320
      %322 = vmatmul.f32.gmra.mxu0 %v180
      %v323 = vpop.f32.mrf.mxu0
      %v324 = vadd.f32 %v271, %v323
      %325 = vmatmul.f32.gmra.mxu0 %v181
      %v326 = vpop.f32.mrf.mxu0
      %v327 = vadd.f32 %v274, %v326
      %328 = vmatmul.f32.gmra.mxu0 %v182
      %v329 = vpop.f32.mrf.mxu0
      %v330 = vadd.f32 %v277, %v329
      %331 = vmatmul.f32.gmra.mxu0 %v183
      %v332 = vpop.f32.mrf.mxu0
      %v333 = vadd.f32 %v280, %v332
      %334 = vdwg.mxu0
      %v335 = vld [vmem:[%s165 + $0x2] sm:$0xff]
      %v336 = vld [vmem:[%s165 + $0xa] sm:$0xff]
      %v337 = vld [vmem:[%s165 + $0x1a] sm:$0xff]
      %v338 = vld [vmem:[%s165 + $0x22] sm:$0xff]
      %v339 = vld [vmem:[%s165 + $0x32] sm:$0xff]
      %v340 = vld [vmem:[%s165 + $0x3a] sm:$0xff]
      %v341 = vld [vmem:[%s165 + $0x4a] sm:$0xff]
      %v342 = vld [vmem:[%s165 + $0x52] sm:$0xff]
      %v343 = vld [vmem:[%s165 + $0x62] sm:$0xff]
      %v344 = vld [vmem:[%s165 + $0x6a] sm:$0xff]
      %v345 = vld [vmem:[%s165 + $0x7a] sm:$0xff]
      %v346 = vld [vmem:[%s165 + $0x82] sm:$0xff]
      %s347 = scalar_lea.vmem %s1, 256
      %v348 = vld [vmem:[%s347] sm:$0xff]
      %v349 = vld [vmem:[%s347 + $0x8] sm:$0xff]
      %v350 = vld [vmem:[%s347 + $0x10] sm:$0xff]
      %v351 = vld [vmem:[%s347 + $0x18] sm:$0xff]
      %v352 = vld [vmem:[%s347 + $0x20] sm:$0xff]
      %v353 = vld [vmem:[%s347 + $0x28] sm:$0xff]
      %v354 = vld [vmem:[%s347 + $0x30] sm:$0xff]
      %v355 = vld [vmem:[%s347 + $0x38] sm:$0xff]
      %v356 = vld [vmem:[%s347 + $0x40] sm:$0xff]
      %v357 = vld [vmem:[%s347 + $0x48] sm:$0xff]
      %v358 = vld [vmem:[%s347 + $0x50] sm:$0xff]
      %v359 = vld [vmem:[%s347 + $0x58] sm:$0xff]
      %v360 = vld [vmem:[%s347 + $0x60] sm:$0xff]
      %v361 = vld [vmem:[%s347 + $0x68] sm:$0xff]
      %v362 = vld [vmem:[%s347 + $0x70] sm:$0xff]
      %v363 = vld [vmem:[%s347 + $0x78] sm:$0xff]
      %364 = vmatpush.msra.mxu0 %v363
      %365 = vmatpush.msra.mxu0 %v362
      %366 = vmatpush.msra.mxu0 %v361
      %367 = vmatpush.msra.mxu0 %v360
      %368 = vmatpush.msra.mxu0 %v359
      %369 = vmatpush.msra.mxu0 %v358
      %370 = vmatpush.msra.mxu0 %v357
      %371 = vmatpush.msra.mxu0 %v356
      %372 = vmatpush.msra.mxu0 %v355
      %373 = vmatpush.msra.mxu0 %v354
      %374 = vmatpush.msra.mxu0 %v353
      %375 = vmatpush.msra.mxu0 %v352
      %376 = vmatpush.msra.mxu0 %v351
      %377 = vmatpush.msra.mxu0 %v350
      %378 = vmatpush.msra.mxu0 %v349
      %379 = vmatpush.msra.mxu0 %v348
      %380 = vmatmul.f32.gmra.mxu0 %v335
      %v381 = vpop.f32.mrf.mxu0
      %v382 = vadd.f32 0.0, %v381
      %383 = vmatmul.f32.gmra.mxu0 %v336
      %v384 = vpop.f32.mrf.mxu0
      %v385 = vadd.f32 0.0, %v384
      %386 = vmatmul.f32.gmra.mxu0 %v337
      %v387 = vpop.f32.mrf.mxu0
      %v388 = vadd.f32 0.0, %v387
      %389 = vmatmul.f32.gmra.mxu0 %v338
      %v390 = vpop.f32.mrf.mxu0
      %v391 = vadd.f32 0.0, %v390
      %392 = vmatmul.f32.gmra.mxu0 %v339
      %v393 = vpop.f32.mrf.mxu0
      %v394 = vadd.f32 0.0, %v393
      %395 = vmatmul.f32.gmra.mxu0 %v340
      %v396 = vpop.f32.mrf.mxu0
      %v397 = vadd.f32 0.0, %v396
      %398 = vmatmul.f32.gmra.mxu0 %v341
      %v399 = vpop.f32.mrf.mxu0
      %v400 = vadd.f32 0.0, %v399
      %401 = vmatmul.f32.gmra.mxu0 %v342
      %v402 = vpop.f32.mrf.mxu0
      %v403 = vadd.f32 0.0, %v402
      %404 = vmatmul.f32.gmra.mxu0 %v343
      %v405 = vpop.f32.mrf.mxu0
      %v406 = vadd.f32 0.0, %v405
      %407 = vmatmul.f32.gmra.mxu0 %v344
      %v408 = vpop.f32.mrf.mxu0
      %v409 = vadd.f32 0.0, %v408
      %410 = vmatmul.f32.gmra.mxu0 %v345
      %v411 = vpop.f32.mrf.mxu0
      %v412 = vadd.f32 0.0, %v411
      %413 = vmatmul.f32.gmra.mxu0 %v346
      %v414 = vpop.f32.mrf.mxu0
      %v415 = vadd.f32 0.0, %v414
      %416 = vdwg.mxu0
      %v417 = vadd.f32 %v300, %v382
      %v418 = vadd.f32 %v303, %v385
      %v419 = vadd.f32 %v306, %v388
      %v420 = vadd.f32 %v309, %v391
      %v421 = vadd.f32 %v312, %v394
      %v422 = vadd.f32 %v315, %v397
      %v423 = vadd.f32 %v318, %v400
      %v424 = vadd.f32 %v321, %v403
      %v425 = vadd.f32 %v324, %v406
      %v426 = vadd.f32 %v327, %v409
      %v427 = vadd.f32 %v330, %v412
      %v428 = vadd.f32 %v333, %v415
      %s429 = scalar_lea.vmem %s165, 24
      %v430 = vld [vmem:[%s429] sm:$0xff]
      %v431 = vld [vmem:[%s429 + $0x8] sm:$0xff]
      %v432 = vld [vmem:[%s429 + $0x18] sm:$0xff]
      %v433 = vld [vmem:[%s429 + $0x20] sm:$0xff]
      %v434 = vld [vmem:[%s429 + $0x30] sm:$0xff]
      %v435 = vld [vmem:[%s429 + $0x38] sm:$0xff]
      %v436 = vld [vmem:[%s429 + $0x48] sm:$0xff]
      %v437 = vld [vmem:[%s429 + $0x50] sm:$0xff]
      %v438 = vld [vmem:[%s429 + $0x60] sm:$0xff]
      %v439 = vld [vmem:[%s429 + $0x68] sm:$0xff]
      %v440 = vld [vmem:[%s429 + $0x78] sm:$0xff]
      %v441 = vld [vmem:[%s429 + $0x80] sm:$0xff]
      %s442 = scalar_lea.vmem %s1, 384
      %v443 = vld [vmem:[%s442] sm:$0xff]
      %v444 = vld [vmem:[%s442 + $0x8] sm:$0xff]
      %v445 = vld [vmem:[%s442 + $0x10] sm:$0xff]
      %v446 = vld [vmem:[%s442 + $0x18] sm:$0xff]
      %v447 = vld [vmem:[%s442 + $0x20] sm:$0xff]
      %v448 = vld [vmem:[%s442 + $0x28] sm:$0xff]
      %v449 = vld [vmem:[%s442 + $0x30] sm:$0xff]
      %v450 = vld [vmem:[%s442 + $0x38] sm:$0xff]
      %v451 = vld [vmem:[%s442 + $0x40] sm:$0xff]
      %v452 = vld [vmem:[%s442 + $0x48] sm:$0xff]
      %v453 = vld [vmem:[%s442 + $0x50] sm:$0xff]
      %v454 = vld [vmem:[%s442 + $0x58] sm:$0xff]
      %v455 = vld [vmem:[%s442 + $0x60] sm:$0xff]
      %v456 = vld [vmem:[%s442 + $0x68] sm:$0xff]
      %v457 = vld [vmem:[%s442 + $0x70] sm:$0xff]
      %v458 = vld [vmem:[%s442 + $0x78] sm:$0xff]
      %459 = vmatpush.msra.mxu0 %v458
      %460 = vmatpush.msra.mxu0 %v457
      %461 = vmatpush.msra.mxu0 %v456
      %462 = vmatpush.msra.mxu0 %v455
      %463 = vmatpush.msra.mxu0 %v454
      %464 = vmatpush.msra.mxu0 %v453
      %465 = vmatpush.msra.mxu0 %v452
      %466 = vmatpush.msra.mxu0 %v451
      %467 = vmatpush.msra.mxu0 %v450
      %468 = vmatpush.msra.mxu0 %v449
      %469 = vmatpush.msra.mxu0 %v448
      %470 = vmatpush.msra.mxu0 %v447
      %471 = vmatpush.msra.mxu0 %v446
      %472 = vmatpush.msra.mxu0 %v445
      %473 = vmatpush.msra.mxu0 %v444
      %474 = vmatpush.msra.mxu0 %v443
      %475 = vmatmul.f32.gmra.mxu0 %v430
      %v476 = vpop.f32.mrf.mxu0
      %v477 = vadd.f32 0.0, %v476
      %478 = vmatmul.f32.gmra.mxu0 %v431
      %v479 = vpop.f32.mrf.mxu0
      %v480 = vadd.f32 0.0, %v479
      %481 = vmatmul.f32.gmra.mxu0 %v432
      %v482 = vpop.f32.mrf.mxu0
      %v483 = vadd.f32 0.0, %v482
      %484 = vmatmul.f32.gmra.mxu0 %v433
      %v485 = vpop.f32.mrf.mxu0
      %v486 = vadd.f32 0.0, %v485
      %487 = vmatmul.f32.gmra.mxu0 %v434
      %v488 = vpop.f32.mrf.mxu0
      %v489 = vadd.f32 0.0, %v488
      %490 = vmatmul.f32.gmra.mxu0 %v435
      %v491 = vpop.f32.mrf.mxu0
      %v492 = vadd.f32 0.0, %v491
      %493 = vmatmul.f32.gmra.mxu0 %v436
      %v494 = vpop.f32.mrf.mxu0
      %v495 = vadd.f32 0.0, %v494
      %496 = vmatmul.f32.gmra.mxu0 %v437
      %v497 = vpop.f32.mrf.mxu0
      %v498 = vadd.f32 0.0, %v497
      %499 = vmatmul.f32.gmra.mxu0 %v438
      %v500 = vpop.f32.mrf.mxu0
      %v501 = vadd.f32 0.0, %v500
      %502 = vmatmul.f32.gmra.mxu0 %v439
      %v503 = vpop.f32.mrf.mxu0
      %v504 = vadd.f32 0.0, %v503
      %505 = vmatmul.f32.gmra.mxu0 %v440
      %v506 = vpop.f32.mrf.mxu0
      %v507 = vadd.f32 0.0, %v506
      %508 = vmatmul.f32.gmra.mxu0 %v441
      %v509 = vpop.f32.mrf.mxu0
      %v510 = vadd.f32 0.0, %v509
      %511 = vdwg.mxu0
      %v512 = vadd.f32 %v417, %v477
      %v513 = vadd.f32 %v418, %v480
      %v514 = vadd.f32 %v419, %v483
      %v515 = vadd.f32 %v420, %v486
      %v516 = vadd.f32 %v421, %v489
      %v517 = vadd.f32 %v422, %v492
      %v518 = vadd.f32 %v423, %v495
      %v519 = vadd.f32 %v424, %v498
      %v520 = vadd.f32 %v425, %v501
      %v521 = vadd.f32 %v426, %v504
      %v522 = vadd.f32 %v427, %v507
      %v523 = vadd.f32 %v428, %v510
      %v524 = vld [vmem:[%s429 + $0x1] sm:$0xff]
      %v525 = vld [vmem:[%s429 + $0x9] sm:$0xff]
      %v526 = vld [vmem:[%s429 + $0x19] sm:$0xff]
      %v527 = vld [vmem:[%s429 + $0x21] sm:$0xff]
      %v528 = vld [vmem:[%s429 + $0x31] sm:$0xff]
      %v529 = vld [vmem:[%s429 + $0x39] sm:$0xff]
      %v530 = vld [vmem:[%s429 + $0x49] sm:$0xff]
      %v531 = vld [vmem:[%s429 + $0x51] sm:$0xff]
      %v532 = vld [vmem:[%s429 + $0x61] sm:$0xff]
      %v533 = vld [vmem:[%s429 + $0x69] sm:$0xff]
      %v534 = vld [vmem:[%s429 + $0x79] sm:$0xff]
      %v535 = vld [vmem:[%s429 + $0x81] sm:$0xff]
      %s536 = scalar_lea.vmem %s1, 512
      %v537 = vld [vmem:[%s536] sm:$0xff]
      %v538 = vld [vmem:[%s536 + $0x8] sm:$0xff]
      %v539 = vld [vmem:[%s536 + $0x10] sm:$0xff]
      %v540 = vld [vmem:[%s536 + $0x18] sm:$0xff]
      %v541 = vld [vmem:[%s536 + $0x20] sm:$0xff]
      %v542 = vld [vmem:[%s536 + $0x28] sm:$0xff]
      %v543 = vld [vmem:[%s536 + $0x30] sm:$0xff]
      %v544 = vld [vmem:[%s536 + $0x38] sm:$0xff]
      %v545 = vld [vmem:[%s536 + $0x40] sm:$0xff]
      %v546 = vld [vmem:[%s536 + $0x48] sm:$0xff]
      %v547 = vld [vmem:[%s536 + $0x50] sm:$0xff]
      %v548 = vld [vmem:[%s536 + $0x58] sm:$0xff]
      %v549 = vld [vmem:[%s536 + $0x60] sm:$0xff]
      %v550 = vld [vmem:[%s536 + $0x68] sm:$0xff]
      %v551 = vld [vmem:[%s536 + $0x70] sm:$0xff]
      %v552 = vld [vmem:[%s536 + $0x78] sm:$0xff]
      %553 = vmatpush.msra.mxu0 %v552
      %554 = vmatpush.msra.mxu0 %v551
      %555 = vmatpush.msra.mxu0 %v550
      %556 = vmatpush.msra.mxu0 %v549
      %557 = vmatpush.msra.mxu0 %v548
      %558 = vmatpush.msra.mxu0 %v547
      %559 = vmatpush.msra.mxu0 %v546
      %560 = vmatpush.msra.mxu0 %v545
      %561 = vmatpush.msra.mxu0 %v544
      %562 = vmatpush.msra.mxu0 %v543
      %563 = vmatpush.msra.mxu0 %v542
      %564 = vmatpush.msra.mxu0 %v541
      %565 = vmatpush.msra.mxu0 %v540
      %566 = vmatpush.msra.mxu0 %v539
      %567 = vmatpush.msra.mxu0 %v538
      %568 = vmatpush.msra.mxu0 %v537
      %569 = vmatmul.f32.gmra.mxu0 %v524
      %v570 = vpop.f32.mrf.mxu0
      %v571 = vadd.f32 0.0, %v570
      %572 = vmatmul.f32.gmra.mxu0 %v525
      %v573 = vpop.f32.mrf.mxu0
      %v574 = vadd.f32 0.0, %v573
      %575 = vmatmul.f32.gmra.mxu0 %v526
      %v576 = vpop.f32.mrf.mxu0
      %v577 = vadd.f32 0.0, %v576
      %578 = vmatmul.f32.gmra.mxu0 %v527
      %v579 = vpop.f32.mrf.mxu0
      %v580 = vadd.f32 0.0, %v579
      %581 = vmatmul.f32.gmra.mxu0 %v528
      %v582 = vpop.f32.mrf.mxu0
      %v583 = vadd.f32 0.0, %v582
      %584 = vmatmul.f32.gmra.mxu0 %v529
      %v585 = vpop.f32.mrf.mxu0
      %v586 = vadd.f32 0.0, %v585
      %587 = vmatmul.f32.gmra.mxu0 %v530
      %v588 = vpop.f32.mrf.mxu0
      %v589 = vadd.f32 0.0, %v588
      %590 = vmatmul.f32.gmra.mxu0 %v531
      %v591 = vpop.f32.mrf.mxu0
      %v592 = vadd.f32 0.0, %v591
      %593 = vmatmul.f32.gmra.mxu0 %v532
      %v594 = vpop.f32.mrf.mxu0
      %v595 = vadd.f32 0.0, %v594
      %596 = vmatmul.f32.gmra.mxu0 %v533
      %v597 = vpop.f32.mrf.mxu0
      %v598 = vadd.f32 0.0, %v597
      %599 = vmatmul.f32.gmra.mxu0 %v534
      %v600 = vpop.f32.mrf.mxu0
      %v601 = vadd.f32 0.0, %v600
      %602 = vmatmul.f32.gmra.mxu0 %v535
      %v603 = vpop.f32.mrf.mxu0
      %v604 = vadd.f32 0.0, %v603
      %605 = vdwg.mxu0
      %v606 = vadd.f32 %v512, %v571
      %v607 = vadd.f32 %v513, %v574
      %v608 = vadd.f32 %v514, %v577
      %v609 = vadd.f32 %v515, %v580
      %v610 = vadd.f32 %v516, %v583
      %v611 = vadd.f32 %v517, %v586
      %v612 = vadd.f32 %v518, %v589
      %v613 = vadd.f32 %v519, %v592
      %v614 = vadd.f32 %v520, %v595
      %v615 = vadd.f32 %v521, %v598
      %v616 = vadd.f32 %v522, %v601
      %v617 = vadd.f32 %v523, %v604
      %v618 = vld [vmem:[%s429 + $0x2] sm:$0xff]
      %v619 = vld [vmem:[%s429 + $0xa] sm:$0xff]
      %v620 = vld [vmem:[%s429 + $0x1a] sm:$0xff]
      %v621 = vld [vmem:[%s429 + $0x22] sm:$0xff]
      %v622 = vld [vmem:[%s429 + $0x32] sm:$0xff]
      %v623 = vld [vmem:[%s429 + $0x3a] sm:$0xff]
      %v624 = vld [vmem:[%s429 + $0x4a] sm:$0xff]
      %v625 = vld [vmem:[%s429 + $0x52] sm:$0xff]
      %v626 = vld [vmem:[%s429 + $0x62] sm:$0xff]
      %v627 = vld [vmem:[%s429 + $0x6a] sm:$0xff]
      %v628 = vld [vmem:[%s429 + $0x7a] sm:$0xff]
      %v629 = vld [vmem:[%s429 + $0x82] sm:$0xff]
      %s630 = scalar_lea.vmem %s1, 640
      %v631 = vld [vmem:[%s630] sm:$0xff]
      %v632 = vld [vmem:[%s630 + $0x8] sm:$0xff]
      %v633 = vld [vmem:[%s630 + $0x10] sm:$0xff]
      %v634 = vld [vmem:[%s630 + $0x18] sm:$0xff]
      %v635 = vld [vmem:[%s630 + $0x20] sm:$0xff]
      %v636 = vld [vmem:[%s630 + $0x28] sm:$0xff]
      %v637 = vld [vmem:[%s630 + $0x30] sm:$0xff]
      %v638 = vld [vmem:[%s630 + $0x38] sm:$0xff]
      %v639 = vld [vmem:[%s630 + $0x40] sm:$0xff]
      %v640 = vld [vmem:[%s630 + $0x48] sm:$0xff]
      %v641 = vld [vmem:[%s630 + $0x50] sm:$0xff]
      %v642 = vld [vmem:[%s630 + $0x58] sm:$0xff]
      %v643 = vld [vmem:[%s630 + $0x60] sm:$0xff]
      %v644 = vld [vmem:[%s630 + $0x68] sm:$0xff]
      %v645 = vld [vmem:[%s630 + $0x70] sm:$0xff]
      %v646 = vld [vmem:[%s630 + $0x78] sm:$0xff]
      %647 = vmatpush.msra.mxu0 %v646
      %648 = vmatpush.msra.mxu0 %v645
      %649 = vmatpush.msra.mxu0 %v644
      %650 = vmatpush.msra.mxu0 %v643
      %651 = vmatpush.msra.mxu0 %v642
      %652 = vmatpush.msra.mxu0 %v641
      %653 = vmatpush.msra.mxu0 %v640
      %654 = vmatpush.msra.mxu0 %v639
      %655 = vmatpush.msra.mxu0 %v638
      %656 = vmatpush.msra.mxu0 %v637
      %657 = vmatpush.msra.mxu0 %v636
      %658 = vmatpush.msra.mxu0 %v635
      %659 = vmatpush.msra.mxu0 %v634
      %660 = vmatpush.msra.mxu0 %v633
      %661 = vmatpush.msra.mxu0 %v632
      %662 = vmatpush.msra.mxu0 %v631
      %663 = vmatmul.f32.gmra.mxu0 %v618
      %v664 = vpop.f32.mrf.mxu0
      %v665 = vadd.f32 0.0, %v664
      %666 = vmatmul.f32.gmra.mxu0 %v619
      %v667 = vpop.f32.mrf.mxu0
      %v668 = vadd.f32 0.0, %v667
      %669 = vmatmul.f32.gmra.mxu0 %v620
      %v670 = vpop.f32.mrf.mxu0
      %v671 = vadd.f32 0.0, %v670
      %672 = vmatmul.f32.gmra.mxu0 %v621
      %v673 = vpop.f32.mrf.mxu0
      %v674 = vadd.f32 0.0, %v673
      %675 = vmatmul.f32.gmra.mxu0 %v622
      %v676 = vpop.f32.mrf.mxu0
      %v677 = vadd.f32 0.0, %v676
      %678 = vmatmul.f32.gmra.mxu0 %v623
      %v679 = vpop.f32.mrf.mxu0
      %v680 = vadd.f32 0.0, %v679
      %681 = vmatmul.f32.gmra.mxu0 %v624
      %v682 = vpop.f32.mrf.mxu0
      %v683 = vadd.f32 0.0, %v682
      %684 = vmatmul.f32.gmra.mxu0 %v625
      %v685 = vpop.f32.mrf.mxu0
      %v686 = vadd.f32 0.0, %v685
      %687 = vmatmul.f32.gmra.mxu0 %v626
      %v688 = vpop.f32.mrf.mxu0
      %v689 = vadd.f32 0.0, %v688
      %690 = vmatmul.f32.gmra.mxu0 %v627
      %v691 = vpop.f32.mrf.mxu0
      %v692 = vadd.f32 0.0, %v691
      %693 = vmatmul.f32.gmra.mxu0 %v628
      %v694 = vpop.f32.mrf.mxu0
      %v695 = vadd.f32 0.0, %v694
      %696 = vmatmul.f32.gmra.mxu0 %v629
      %v697 = vpop.f32.mrf.mxu0
      %v698 = vadd.f32 0.0, %v697
      %699 = vdwg.mxu0
      %v700 = vadd.f32 %v606, %v665
      %v701 = vadd.f32 %v607, %v668
      %v702 = vadd.f32 %v608, %v671
      %v703 = vadd.f32 %v609, %v674
      %v704 = vadd.f32 %v610, %v677
      %v705 = vadd.f32 %v611, %v680
      %v706 = vadd.f32 %v612, %v683
      %v707 = vadd.f32 %v613, %v686
      %v708 = vadd.f32 %v614, %v689
      %v709 = vadd.f32 %v615, %v692
      %v710 = vadd.f32 %v616, %v695
      %v711 = vadd.f32 %v617, %v698
      %s712 = scalar_lea.vmem %s165, 48
      %v713 = vld [vmem:[%s712] sm:$0xff]
      %v714 = vld [vmem:[%s712 + $0x8] sm:$0xff]
      %v715 = vld [vmem:[%s712 + $0x18] sm:$0xff]
      %v716 = vld [vmem:[%s712 + $0x20] sm:$0xff]
      %v717 = vld [vmem:[%s712 + $0x30] sm:$0xff]
      %v718 = vld [vmem:[%s712 + $0x38] sm:$0xff]
      %v719 = vld [vmem:[%s712 + $0x48] sm:$0xff]
      %v720 = vld [vmem:[%s712 + $0x50] sm:$0xff]
      %v721 = vld [vmem:[%s712 + $0x60] sm:$0xff]
      %v722 = vld [vmem:[%s712 + $0x68] sm:$0xff]
      %v723 = vld [vmem:[%s712 + $0x78] sm:$0xff]
      %v724 = vld [vmem:[%s712 + $0x80] sm:$0xff]
      %s725 = scalar_lea.vmem %s1, 768
      %v726 = vld [vmem:[%s725] sm:$0xff]
      %v727 = vld [vmem:[%s725 + $0x8] sm:$0xff]
      %v728 = vld [vmem:[%s725 + $0x10] sm:$0xff]
      %v729 = vld [vmem:[%s725 + $0x18] sm:$0xff]
      %v730 = vld [vmem:[%s725 + $0x20] sm:$0xff]
      %v731 = vld [vmem:[%s725 + $0x28] sm:$0xff]
      %v732 = vld [vmem:[%s725 + $0x30] sm:$0xff]
      %v733 = vld [vmem:[%s725 + $0x38] sm:$0xff]
      %v734 = vld [vmem:[%s725 + $0x40] sm:$0xff]
      %v735 = vld [vmem:[%s725 + $0x48] sm:$0xff]
      %v736 = vld [vmem:[%s725 + $0x50] sm:$0xff]
      %v737 = vld [vmem:[%s725 + $0x58] sm:$0xff]
      %v738 = vld [vmem:[%s725 + $0x60] sm:$0xff]
      %v739 = vld [vmem:[%s725 + $0x68] sm:$0xff]
      %v740 = vld [vmem:[%s725 + $0x70] sm:$0xff]
      %v741 = vld [vmem:[%s725 + $0x78] sm:$0xff]
      %742 = vmatpush.msra.mxu0 %v741
      %743 = vmatpush.msra.mxu0 %v740
      %744 = vmatpush.msra.mxu0 %v739
      %745 = vmatpush.msra.mxu0 %v738
      %746 = vmatpush.msra.mxu0 %v737
      %747 = vmatpush.msra.mxu0 %v736
      %748 = vmatpush.msra.mxu0 %v735
      %749 = vmatpush.msra.mxu0 %v734
      %750 = vmatpush.msra.mxu0 %v733
      %751 = vmatpush.msra.mxu0 %v732
      %752 = vmatpush.msra.mxu0 %v731
      %753 = vmatpush.msra.mxu0 %v730
      %754 = vmatpush.msra.mxu0 %v729
      %755 = vmatpush.msra.mxu0 %v728
      %756 = vmatpush.msra.mxu0 %v727
      %757 = vmatpush.msra.mxu0 %v726
      %758 = vmatmul.f32.gmra.mxu0 %v713
      %v759 = vpop.f32.mrf.mxu0
      %v760 = vadd.f32 0.0, %v759
      %761 = vmatmul.f32.gmra.mxu0 %v714
      %v762 = vpop.f32.mrf.mxu0
      %v763 = vadd.f32 0.0, %v762
      %764 = vmatmul.f32.gmra.mxu0 %v715
      %v765 = vpop.f32.mrf.mxu0
      %v766 = vadd.f32 0.0, %v765
      %767 = vmatmul.f32.gmra.mxu0 %v716
      %v768 = vpop.f32.mrf.mxu0
      %v769 = vadd.f32 0.0, %v768
      %770 = vmatmul.f32.gmra.mxu0 %v717
      %v771 = vpop.f32.mrf.mxu0
      %v772 = vadd.f32 0.0, %v771
      %773 = vmatmul.f32.gmra.mxu0 %v718
      %v774 = vpop.f32.mrf.mxu0
      %v775 = vadd.f32 0.0, %v774
      %776 = vmatmul.f32.gmra.mxu0 %v719
      %v777 = vpop.f32.mrf.mxu0
      %v778 = vadd.f32 0.0, %v777
      %779 = vmatmul.f32.gmra.mxu0 %v720
      %v780 = vpop.f32.mrf.mxu0
      %v781 = vadd.f32 0.0, %v780
      %782 = vmatmul.f32.gmra.mxu0 %v721
      %v783 = vpop.f32.mrf.mxu0
      %v784 = vadd.f32 0.0, %v783
      %785 = vmatmul.f32.gmra.mxu0 %v722
      %v786 = vpop.f32.mrf.mxu0
      %v787 = vadd.f32 0.0, %v786
      %788 = vmatmul.f32.gmra.mxu0 %v723
      %v789 = vpop.f32.mrf.mxu0
      %v790 = vadd.f32 0.0, %v789
      %791 = vmatmul.f32.gmra.mxu0 %v724
      %v792 = vpop.f32.mrf.mxu0
      %v793 = vadd.f32 0.0, %v792
      %794 = vdwg.mxu0
      %v795 = vadd.f32 %v700, %v760
      %v796 = vadd.f32 %v701, %v763
      %v797 = vadd.f32 %v702, %v766
      %v798 = vadd.f32 %v703, %v769
      %v799 = vadd.f32 %v704, %v772
      %v800 = vadd.f32 %v705, %v775
      %v801 = vadd.f32 %v706, %v778
      %v802 = vadd.f32 %v707, %v781
      %v803 = vadd.f32 %v708, %v784
      %v804 = vadd.f32 %v709, %v787
      %v805 = vadd.f32 %v710, %v790
      %v806 = vadd.f32 %v711, %v793
      %v807 = vld [vmem:[%s712 + $0x1] sm:$0xff]
      %v808 = vld [vmem:[%s712 + $0x9] sm:$0xff]
      %v809 = vld [vmem:[%s712 + $0x19] sm:$0xff]
      %v810 = vld [vmem:[%s712 + $0x21] sm:$0xff]
      %v811 = vld [vmem:[%s712 + $0x31] sm:$0xff]
      %v812 = vld [vmem:[%s712 + $0x39] sm:$0xff]
      %v813 = vld [vmem:[%s712 + $0x49] sm:$0xff]
      %v814 = vld [vmem:[%s712 + $0x51] sm:$0xff]
      %v815 = vld [vmem:[%s712 + $0x61] sm:$0xff]
      %v816 = vld [vmem:[%s712 + $0x69] sm:$0xff]
      %v817 = vld [vmem:[%s712 + $0x79] sm:$0xff]
      %v818 = vld [vmem:[%s712 + $0x81] sm:$0xff]
      %s819 = scalar_lea.vmem %s1, 896
      %v820 = vld [vmem:[%s819] sm:$0xff]
      %v821 = vld [vmem:[%s819 + $0x8] sm:$0xff]
      %v822 = vld [vmem:[%s819 + $0x10] sm:$0xff]
      %v823 = vld [vmem:[%s819 + $0x18] sm:$0xff]
      %v824 = vld [vmem:[%s819 + $0x20] sm:$0xff]
      %v825 = vld [vmem:[%s819 + $0x28] sm:$0xff]
      %v826 = vld [vmem:[%s819 + $0x30] sm:$0xff]
      %v827 = vld [vmem:[%s819 + $0x38] sm:$0xff]
      %v828 = vld [vmem:[%s819 + $0x40] sm:$0xff]
      %v829 = vld [vmem:[%s819 + $0x48] sm:$0xff]
      %v830 = vld [vmem:[%s819 + $0x50] sm:$0xff]
      %v831 = vld [vmem:[%s819 + $0x58] sm:$0xff]
      %v832 = vld [vmem:[%s819 + $0x60] sm:$0xff]
      %v833 = vld [vmem:[%s819 + $0x68] sm:$0xff]
      %v834 = vld [vmem:[%s819 + $0x70] sm:$0xff]
      %v835 = vld [vmem:[%s819 + $0x78] sm:$0xff]
      %836 = vmatpush.msra.mxu0 %v835
      %837 = vmatpush.msra.mxu0 %v834
      %838 = vmatpush.msra.mxu0 %v833
      %839 = vmatpush.msra.mxu0 %v832
      %840 = vmatpush.msra.mxu0 %v831
      %841 = vmatpush.msra.mxu0 %v830
      %842 = vmatpush.msra.mxu0 %v829
      %843 = vmatpush.msra.mxu0 %v828
      %844 = vmatpush.msra.mxu0 %v827
      %845 = vmatpush.msra.mxu0 %v826
      %846 = vmatpush.msra.mxu0 %v825
      %847 = vmatpush.msra.mxu0 %v824
      %848 = vmatpush.msra.mxu0 %v823
      %849 = vmatpush.msra.mxu0 %v822
      %850 = vmatpush.msra.mxu0 %v821
      %851 = vmatpush.msra.mxu0 %v820
      %852 = vmatmul.f32.gmra.mxu0 %v807
      %v853 = vpop.f32.mrf.mxu0
      %v854 = vadd.f32 0.0, %v853
      %855 = vmatmul.f32.gmra.mxu0 %v808
      %v856 = vpop.f32.mrf.mxu0
      %v857 = vadd.f32 0.0, %v856
      %858 = vmatmul.f32.gmra.mxu0 %v809
      %v859 = vpop.f32.mrf.mxu0
      %v860 = vadd.f32 0.0, %v859
      %861 = vmatmul.f32.gmra.mxu0 %v810
      %v862 = vpop.f32.mrf.mxu0
      %v863 = vadd.f32 0.0, %v862
      %864 = vmatmul.f32.gmra.mxu0 %v811
      %v865 = vpop.f32.mrf.mxu0
      %v866 = vadd.f32 0.0, %v865
      %867 = vmatmul.f32.gmra.mxu0 %v812
      %v868 = vpop.f32.mrf.mxu0
      %v869 = vadd.f32 0.0, %v868
      %870 = vmatmul.f32.gmra.mxu0 %v813
      %v871 = vpop.f32.mrf.mxu0
      %v872 = vadd.f32 0.0, %v871
      %873 = vmatmul.f32.gmra.mxu0 %v814
      %v874 = vpop.f32.mrf.mxu0
      %v875 = vadd.f32 0.0, %v874
      %876 = vmatmul.f32.gmra.mxu0 %v815
      %v877 = vpop.f32.mrf.mxu0
      %v878 = vadd.f32 0.0, %v877
      %879 = vmatmul.f32.gmra.mxu0 %v816
      %v880 = vpop.f32.mrf.mxu0
      %v881 = vadd.f32 0.0, %v880
      %882 = vmatmul.f32.gmra.mxu0 %v817
      %v883 = vpop.f32.mrf.mxu0
      %v884 = vadd.f32 0.0, %v883
      %885 = vmatmul.f32.gmra.mxu0 %v818
      %v886 = vpop.f32.mrf.mxu0
      %v887 = vadd.f32 0.0, %v886
      %888 = vdwg.mxu0
      %v889 = vadd.f32 %v795, %v854
      %v890 = vadd.f32 %v796, %v857
      %v891 = vadd.f32 %v797, %v860
      %v892 = vadd.f32 %v798, %v863
      %v893 = vadd.f32 %v799, %v866
      %v894 = vadd.f32 %v800, %v869
      %v895 = vadd.f32 %v801, %v872
      %v896 = vadd.f32 %v802, %v875
      %v897 = vadd.f32 %v803, %v878
      %v898 = vadd.f32 %v804, %v881
      %v899 = vadd.f32 %v805, %v884
      %v900 = vadd.f32 %v806, %v887
      %v901 = vld [vmem:[%s712 + $0x2] sm:$0xff]
      %v902 = vld [vmem:[%s712 + $0xa] sm:$0xff]
      %v903 = vld [vmem:[%s712 + $0x1a] sm:$0xff]
      %v904 = vld [vmem:[%s712 + $0x22] sm:$0xff]
      %v905 = vld [vmem:[%s712 + $0x32] sm:$0xff]
      %v906 = vld [vmem:[%s712 + $0x3a] sm:$0xff]
      %v907 = vld [vmem:[%s712 + $0x4a] sm:$0xff]
      %v908 = vld [vmem:[%s712 + $0x52] sm:$0xff]
      %v909 = vld [vmem:[%s712 + $0x62] sm:$0xff]
      %v910 = vld [vmem:[%s712 + $0x6a] sm:$0xff]
      %v911 = vld [vmem:[%s712 + $0x7a] sm:$0xff]
      %v912 = vld [vmem:[%s712 + $0x82] sm:$0xff]
      %s913 = scalar_lea.vmem %s1, 1024
      %v914 = vld [vmem:[%s913] sm:$0xff]
      %v915 = vld [vmem:[%s913 + $0x8] sm:$0xff]
      %v916 = vld [vmem:[%s913 + $0x10] sm:$0xff]
      %v917 = vld [vmem:[%s913 + $0x18] sm:$0xff]
      %v918 = vld [vmem:[%s913 + $0x20] sm:$0xff]
      %v919 = vld [vmem:[%s913 + $0x28] sm:$0xff]
      %v920 = vld [vmem:[%s913 + $0x30] sm:$0xff]
      %v921 = vld [vmem:[%s913 + $0x38] sm:$0xff]
      %v922 = vld [vmem:[%s913 + $0x40] sm:$0xff]
      %v923 = vld [vmem:[%s913 + $0x48] sm:$0xff]
      %v924 = vld [vmem:[%s913 + $0x50] sm:$0xff]
      %v925 = vld [vmem:[%s913 + $0x58] sm:$0xff]
      %v926 = vld [vmem:[%s913 + $0x60] sm:$0xff]
      %v927 = vld [vmem:[%s913 + $0x68] sm:$0xff]
      %v928 = vld [vmem:[%s913 + $0x70] sm:$0xff]
      %v929 = vld [vmem:[%s913 + $0x78] sm:$0xff]
      %930 = vmatpush.msra.mxu0 %v929
      %931 = vmatpush.msra.mxu0 %v928
      %932 = vmatpush.msra.mxu0 %v927
      %933 = vmatpush.msra.mxu0 %v926
      %934 = vmatpush.msra.mxu0 %v925
      %935 = vmatpush.msra.mxu0 %v924
      %936 = vmatpush.msra.mxu0 %v923
      %937 = vmatpush.msra.mxu0 %v922
      %938 = vmatpush.msra.mxu0 %v921
      %939 = vmatpush.msra.mxu0 %v920
      %940 = vmatpush.msra.mxu0 %v919
      %941 = vmatpush.msra.mxu0 %v918
      %942 = vmatpush.msra.mxu0 %v917
      %943 = vmatpush.msra.mxu0 %v916
      %944 = vmatpush.msra.mxu0 %v915
      %945 = vmatpush.msra.mxu0 %v914
      %946 = vmatmul.f32.gmra.mxu0 %v901
      %v947 = vpop.f32.mrf.mxu0
      %v948 = vadd.f32 0.0, %v947
      %949 = vmatmul.f32.gmra.mxu0 %v902
      %v950 = vpop.f32.mrf.mxu0
      %v951 = vadd.f32 0.0, %v950
      %952 = vmatmul.f32.gmra.mxu0 %v903
      %v953 = vpop.f32.mrf.mxu0
      %v954 = vadd.f32 0.0, %v953
      %955 = vmatmul.f32.gmra.mxu0 %v904
      %v956 = vpop.f32.mrf.mxu0
      %v957 = vadd.f32 0.0, %v956
      %958 = vmatmul.f32.gmra.mxu0 %v905
      %v959 = vpop.f32.mrf.mxu0
      %v960 = vadd.f32 0.0, %v959
      %961 = vmatmul.f32.gmra.mxu0 %v906
      %v962 = vpop.f32.mrf.mxu0
      %v963 = vadd.f32 0.0, %v962
      %964 = vmatmul.f32.gmra.mxu0 %v907
      %v965 = vpop.f32.mrf.mxu0
      %v966 = vadd.f32 0.0, %v965
      %967 = vmatmul.f32.gmra.mxu0 %v908
      %v968 = vpop.f32.mrf.mxu0
      %v969 = vadd.f32 0.0, %v968
      %970 = vmatmul.f32.gmra.mxu0 %v909
      %v971 = vpop.f32.mrf.mxu0
      %v972 = vadd.f32 0.0, %v971
      %973 = vmatmul.f32.gmra.mxu0 %v910
      %v974 = vpop.f32.mrf.mxu0
      %v975 = vadd.f32 0.0, %v974
      %976 = vmatmul.f32.gmra.mxu0 %v911
      %v977 = vpop.f32.mrf.mxu0
      %v978 = vadd.f32 0.0, %v977
      %979 = vmatmul.f32.gmra.mxu0 %v912
      %v980 = vpop.f32.mrf.mxu0
      %v981 = vadd.f32 0.0, %v980
      %982 = vdwg.mxu0
      %v983 = vadd.f32 %v889, %v948
      %v984 = vadd.f32 %v890, %v951
      %v985 = vadd.f32 %v891, %v954
      %v986 = vadd.f32 %v892, %v957
      %v987 = vadd.f32 %v893, %v960
      %v988 = vadd.f32 %v894, %v963
      %v989 = vadd.f32 %v895, %v966
      %v990 = vadd.f32 %v896, %v969
      %v991 = vadd.f32 %v897, %v972
      %v992 = vadd.f32 %v898, %v975
      %v993 = vadd.f32 %v899, %v978
      %v994 = vadd.f32 %v900, %v981
      %v995 = vld [vmem:[%s2] sm:$0x1]
      %v996 = vperm.slane %v995, 0
      %v997 = vmul.f32 %v983, %v996
      %v998 = vmul.f32 %v984, %v996
      %v999 = vmul.f32 %v985, %v996
      %v1000 = vmul.f32 %v986, %v996
      %v1001 = vmul.f32 %v987, %v996
      %v1002 = vmul.f32 %v988, %v996
      %v1003 = vmul.f32 %v989, %v996
      %v1004 = vmul.f32 %v990, %v996
      %v1005 = vmul.f32 %v991, %v996
      %v1006 = vmul.f32 %v992, %v996
      %v1007 = vmul.f32 %v993, %v996
      %v1008 = vmul.f32 %v994, %v996
      %v1009 = vld [vmem:[%s2 + $0x1] sm:$0x1]
      %v1010 = vperm.slane %v1009, 0
      %v1011 = vadd.f32 %v997, %v1010
      %v1012 = vadd.f32 %v998, %v1010
      %v1013 = vadd.f32 %v999, %v1010
      %v1014 = vadd.f32 %v1000, %v1010
      %v1015 = vadd.f32 %v1001, %v1010
      %v1016 = vadd.f32 %v1002, %v1010
      %v1017 = vadd.f32 %v1003, %v1010
      %v1018 = vadd.f32 %v1004, %v1010
      %v1019 = vadd.f32 %v1005, %v1010
      %v1020 = vadd.f32 %v1006, %v1010
      %v1021 = vadd.f32 %v1007, %v1010
      %v1022 = vadd.f32 %v1008, %v1010
      %v1023 = vmax.f32 %v1011, 0.0
      %v1024 = vmax.f32 %v1012, 0.0
      %v1025 = vmax.f32 %v1013, 0.0
      %v1026 = vmax.f32 %v1014, 0.0
      %v1027 = vmax.f32 %v1015, 0.0
      %v1028 = vmax.f32 %v1016, 0.0
      %v1029 = vmax.f32 %v1017, 0.0
      %v1030 = vmax.f32 %v1018, 0.0
      %v1031 = vmax.f32 %v1019, 0.0
      %v1032 = vmax.f32 %v1020, 0.0
      %v1033 = vmax.f32 %v1021, 0.0
      %v1034 = vmax.f32 %v1022, 0.0
      %1035 = vst [vmem:[%s170] sm:$0xff] %v1023
      %1036 = vst [vmem:[%s170 + $0x8] sm:$0xff] %v1024
      %1037 = vst [vmem:[%s170 + $0x10] sm:$0xff] %v1025
      %1038 = vst [vmem:[%s170 + $0x18] sm:$0xff] %v1026
      %1039 = vst [vmem:[%s170 + $0x20] sm:$0xff] %v1027
      %1040 = vst [vmem:[%s170 + $0x28] sm:$0xff] %v1028
      %1041 = vst [vmem:[%s170 + $0x30] sm:$0xff] %v1029
      %1042 = vst [vmem:[%s170 + $0x38] sm:$0xff] %v1030
      %1043 = vst [vmem:[%s170 + $0x40] sm:$0xff] %v1031
      %1044 = vst [vmem:[%s170 + $0x48] sm:$0xff] %v1032
      %1045 = vst [vmem:[%s170 + $0x50] sm:$0xff] %v1033
      %1046 = vst [vmem:[%s170 + $0x58] sm:$0xff] %v1034
      %s1047 = smul.u32 12, %s14
      %p1048 = scmp.lt.s32.totalorder %s1047, 71
      %s1049 = scalar_select %p1048, %s1047, 71
      %s1050 = smul.addr %s1049, 8
      %s1051 = scalar_lea.vmem %s3, %s1050
      // Predicated region
      $region33: #{conv_module_ex.3} parent=31 // pred_check
        %p1052 = pneg %p100
      $region34: #{conv_module_ex.3} parent=31 // pred_check_branch
        %1054 = sbr.rel (%p1052) target = $region36
      $region35: #{conv_module_ex.3} parent=31 // pred_region
        %s1055 = smul.u32 12, %s14
      $region36: #{conv_module_ex.3} parent=31 // pred_fallthru
        _
    $region32: #{conv_module_ex.3} parent=5 // pred_fallthru
      _
    %p1056 = scmp.le.s32.totalorder 2, %s9
    // Predicated region
    $region37: #{conv_module_ex.3} parent=5 // pred_check
      %p1057 = pneg %p1056
    $region38: #{conv_module_ex.3} parent=5 // pred_check_branch
      %1059 = sbr.rel (%p1057) target = $region40
    $region39: #{conv_module_ex.3} parent=5 // pred_region
      %s1060 = ssub.s32 %s9, 2
      // Predicated region
      $region41: #{conv_module_ex.3} parent=39 // pred_check
        %p1061 = pneg %p106
      $region42: #{conv_module_ex.3} parent=39 // pred_check_branch
        %1063 = sbr.rel (%p1061) target = $region44
      $region43: #{conv_module_ex.3} parent=39 // pred_region
        %s1064 = smul.u32 12, %s15
        %p1065 = scmp.lt.s32.totalorder %s1064, 71
        %s1066 = scalar_select %p1065, %s1064, 71
        %s1067 = smul.addr %s1066, 8
        %s1068 = scalar_lea.vmem %s3, %s1067
      $region44: #{conv_module_ex.3} parent=39 // pred_fallthru
        _
    $region40: #{conv_module_ex.3} parent=5 // pred_fallthru
      _
  $region6: #{conv_module_ex.3} parent=0 // loop_footer
    %s13 = sadd.s32 1, %s9
  $region7: #{conv_module_ex.3} parent=0 // loop_footer_branch
    %8 = sbr.rel target = $region3
  $region8: #{conv_module_ex.3} parent=0 // loop_exit
    _

</llo_original>
